<compile_context>
chip_gen: v7x
topology: tpu7x:2x2x1
jax: 0.10.0
libtpu: 0.0.40
codegen_flags: <defaults>
</compile_context>

<pallas_src>
import functools
import math

import jax
import jax.numpy as jnp
import numpy as np
from jax import lax
from jax.experimental import pallas as pl

# ---------------------------- config (TransformerConfig) ----------------------------
HIDDEN = 32          # config.hidden_size
N_HEADS = 4          # config.num_attention_heads
HEAD_DIM = HIDDEN // N_HEADS
INTERMEDIATE = 64    # config.intermediate_size
LN_EPS = 1e-5        # torch.nn.LayerNorm default
VOCAB = 128          # config.vocab_size (lane-dense lm_head output)
NUM_LAYERS = 2       # config.num_decoder_layers

BATCH = 2
SEQ = 8

_REFS_PER_LAYER = 10  # w_qkv, b_qkv, w_o, b_o, ln1, w1, b1, w2, b2, ln3


# ---------------------------- in-kernel helpers ----------------------------
def _layernorm(x, ln_ref):
    # ln_ref: (2, H) -> row 0 = gamma, row 1 = beta
    gamma = ln_ref[0:1, :]
    beta = ln_ref[1:2, :]
    mean = jnp.mean(x, axis=-1, keepdims=True)
    var = jnp.mean((x - mean) ** 2, axis=-1, keepdims=True)
    return (x - mean) * lax.rsqrt(var + LN_EPS) * gamma + beta


def _self_attention(x, big_mask, w_qkv_ref, b_qkv_ref, w_o_ref, b_o_ref, B, S, H):
    """Fused-QKV multi-head self-attention over the folded (NH*B*S, hd) layout.

    One MXU push for QK^T and one for PV (no per-(batch,head) micro-matmuls); the
    additive block-diagonal `big_mask` makes cross-(batch,head) score entries vanish
    after softmax.
    """
    nh = N_HEADS
    hd = H // nh
    bs = B * S
    scale = 1.0 / math.sqrt(hd)

    # Fused QKV projection: one (B*S, H) x (H, 3H) MXU push.
    qkv = jnp.dot(x, w_qkv_ref[...], preferred_element_type=jnp.float32) + b_qkv_ref[...]

    def fold(base):
        # column group [base, base+H) of qkv -> (NH*B*S, hd); row (h*B + b)*S + s.
        return jnp.concatenate(
            [qkv[:, base + h * hd: base + (h + 1) * hd] for h in range(nh)], axis=0)

    q = fold(0) * scale
    k = fold(H)
    v = fold(2 * H)

    # scores over all (batch, head) blocks at once: (Z*S, Z*S), Z = NH*B
    s = lax.dot_general(q, k, (((1,), (1,)), ((), ())),
                        preferred_element_type=jnp.float32)
    s = s + big_mask
    m = jnp.max(s, axis=-1, keepdims=True)
    p = jnp.exp(s - m)
    p = p / jnp.sum(p, axis=-1, keepdims=True)      # exact softmax (no approx recip)

    ctx_f = jnp.dot(p, v, preferred_element_type=jnp.float32)        # (Z*S, hd)
    ctx = jnp.concatenate(                                            # -> (B*S, H)
        [ctx_f[h * bs:(h + 1) * bs, :] for h in range(nh)], axis=1)
    return jnp.dot(ctx, w_o_ref[...], preferred_element_type=jnp.float32) + b_o_ref[...]


# ---------------------------- fused full-forward kernel ----------------------------
def _fused_forward_kernel(num_layers, ids_ref, big_mask_ref, tok_emb_ref, pos_emb_ref,
                          *rest):
    layer_refs = rest[:num_layers * _REFS_PER_LAYER]
    lm_w_ref, lm_b_ref, out_ref = rest[num_layers * _REFS_PER_LAYER:]

    S, H = pos_emb_ref.shape
    BS = ids_ref.shape[0]
    B = BS // S
    V = tok_emb_ref.shape[0]

    # --- TransformerEmbedding: token lookup via one-hot MXU matmul + positions ---
    ids = ids_ref[...]                                               # (B*S, 1) int32
    onehot = (lax.broadcasted_iota(jnp.int32, (BS, V), 1) == ids).astype(jnp.float32)
    x = jnp.dot(onehot, tok_emb_ref[...].astype(jnp.float32),
                preferred_element_type=jnp.float32)
    pos = pos_emb_ref[...].astype(jnp.float32)                       # (S, H)
    x = x + jnp.concatenate([pos for _ in range(B)], axis=0)         # (B*S, H)

    big_mask = big_mask_ref[...].astype(jnp.float32)                 # shared by layers

    # --- static Python loop over decoder layers; all weights resident in VMEM ---
    for l in range(num_layers):
        (w_qkv, b_qkv, w_o, b_o, ln1,
         w1, b1, w2, b2, ln3) = layer_refs[l * _REFS_PER_LAYER:(l + 1) * _REFS_PER_LAYER]

        # SelfAttentionBlock: x = LN(x + MHA(x, x, x, mask))   (dropout = identity)
        attn = _self_attention(x, big_mask, w_qkv, b_qkv, w_o, b_o, B, S, H)
        x = _layernorm(x + attn, ln1)

        # FeedForwardBlock: x = LN(x + W2 relu(W1 x + b1) + b2)
        h = jnp.maximum(
            jnp.dot(x, w1[...], preferred_element_type=jnp.float32) + b1[...], 0.0)
        y = jnp.dot(h, w2[...], preferred_element_type=jnp.float32) + b2[...]
        x = _layernorm(x + y, ln3)

    # --- lm_head: (B*S, H) x (H, V=128) -> lane-dense logits store ---
    logits = jnp.dot(x, lm_w_ref[...], preferred_element_type=jnp.float32) + lm_b_ref[...]
    out_ref[...] = logits.astype(out_ref.dtype)


# ---------------------------- wrapper ----------------------------
def _block_diag_mask(attention_mask, n_heads):
    """(B, S, S) additive mask -> (Z*S, Z*S) additive mask, Z = NH*B, z = head*B + batch.

    Diagonal (batch, head) blocks carry the user's mask; every off-block entry is -1e9
    so softmax zeroes cross-(batch, head) attention in the folded-layout matmul.
    Built once per forward (outside the kernel), shared by all layers.
    """
    B, S, _ = attention_mask.shape
    Z = n_heads * B
    rows = jnp.tile(attention_mask.astype(jnp.float32), (n_heads, 1, 1))   # (Z, S, S)
    content = jnp.tile(rows.reshape(Z * S, S), (1, Z))                     # (Z*S, Z*S)
    zi = jnp.arange(Z * S) // S
    same = zi[:, None] == zi[None, :]
    return jnp.where(same, content, -1e9)


@jax.jit
def decoder_only_transformer_forward(kernel_model, input_ids, attention_mask_self):
    """DecoderOnlyTransformer.forward: embeddings -> NUM_LAYERS DecoderBlocks (cross-attn
    skipped: hidden_states_encoder is always None) -> lm_head.  Single pallas_call."""
    B, S = input_ids.shape
    ids2 = input_ids.reshape(B * S, 1).astype(jnp.int32)
    big_mask = _block_diag_mask(attention_mask_self, N_HEADS)

    operands = [ids2, big_mask, kernel_model["tok_emb"], kernel_model["pos_emb"]]
    for layer in kernel_model["layers"]:
        operands.extend(layer)
    operands += [kernel_model["lm_w"], kernel_model["lm_b"]]

    vocab = kernel_model["lm_w"].shape[1]
    num_layers = len(kernel_model["layers"])
    logits = pl.pallas_call(
        functools.partial(_fused_forward_kernel, num_layers),
        out_shape=jax.ShapeDtypeStruct((B * S, vocab), jnp.float32),
    )(*operands)
    return logits.reshape(B, S, vocab)


# ---------------------------- parameters ----------------------------
def _w(key, shape, scale=0.02):
    return (scale * jax.random.normal(key, shape)).astype(jnp.float32)


def init_raw_layer_params(key):
    ks = jax.random.split(key, 14)
    def ln(k):
        g = (1.0 + 0.1 * jax.random.normal(k, (HIDDEN,))).astype(jnp.float32)
        b = (0.1 * jax.random.normal(jax.random.fold_in(k, 1), (HIDDEN,))).astype(jnp.float32)
        return g, b
    ln1_g, ln1_b = ln(ks[8])
    ln3_g, ln3_b = ln(ks[9])
    return {
        "wq": _w(ks[0], (HIDDEN, HIDDEN)), "bq": _w(ks[1], (HIDDEN,)),
        "wk": _w(ks[2], (HIDDEN, HIDDEN)), "bk": _w(ks[3], (HIDDEN,)),
        "wv": _w(ks[4], (HIDDEN, HIDDEN)), "bv": _w(ks[5], (HIDDEN,)),
        "wo": _w(ks[6], (HIDDEN, HIDDEN)), "bo": _w(ks[7], (HIDDEN,)),
        "ln1_g": ln1_g, "ln1_b": ln1_b,
        "w1": _w(ks[10], (HIDDEN, INTERMEDIATE)), "b1": _w(ks[11], (INTERMEDIATE,)),
        "w2": _w(ks[12], (INTERMEDIATE, HIDDEN)), "b2": _w(ks[13], (HIDDEN,)),
        "ln3_g": ln3_g, "ln3_b": ln3_b,
    }


def prepare_layer_for_kernel(p):
    """One-time (init-time) layout plumbing: fused QKV weight/bias, 2-D biases, stacked LN."""
    return [
        jnp.concatenate([p["wq"], p["wk"], p["wv"]], axis=1),       # (H, 3H)
        jnp.concatenate([p["bq"], p["bk"], p["bv"]])[None, :],      # (1, 3H)
        p["wo"], p["bo"][None, :],
        jnp.stack([p["ln1_g"], p["ln1_b"]]),                        # (2, H)
        p["w1"], p["b1"][None, :], p["w2"], p["b2"][None, :],
        jnp.stack([p["ln3_g"], p["ln3_b"]]),                        # (2, H)
    ]


def init_raw_model(key):
    keys = jax.random.split(key, NUM_LAYERS + 3)
    return {
        "tok_emb": _w(keys[0], (VOCAB, HIDDEN)),
        "pos_emb": _w(keys[1], (SEQ, HIDDEN)),
        "layers": [init_raw_layer_params(keys[2 + i]) for i in range(NUM_LAYERS)],
        "lm_w": _w(keys[-1], (HIDDEN, VOCAB)),
        "lm_b": _w(jax.random.fold_in(keys[-1], 1), (VOCAB,)),
    }


def prepare_model_for_kernel(raw):
    return {
        "tok_emb": raw["tok_emb"],
        "pos_emb": raw["pos_emb"],
        "layers": [prepare_layer_for_kernel(p) for p in raw["layers"]],
        "lm_w": raw["lm_w"],
        "lm_b": raw["lm_b"][None, :],
    }


# ---------------------------- pure-JAX reference ----------------------------
def _ref_ln(x, g, b):
    mean = jnp.mean(x, axis=-1, keepdims=True)
    var = jnp.mean((x - mean) ** 2, axis=-1, keepdims=True)
    return (x - mean) / jnp.sqrt(var + LN_EPS) * g + b


def _ref_mha(xq, xkv, mask, p):
    H = xq.shape[-1]
    hd = H // N_HEADS
    q = xq @ p["wq"] + p["bq"]
    k = xkv @ p["wk"] + p["bk"]
    v = xkv @ p["wv"] + p["bv"]
    qh = q.reshape(-1, N_HEADS, hd)
    kh = k.reshape(-1, N_HEADS, hd)
    vh = v.reshape(-1, N_HEADS, hd)
    s = jnp.einsum("qhd,khd->hqk", qh, kh) / math.sqrt(hd) + mask[None]
    prob = jax.nn.softmax(s, axis=-1)
    ctx = jnp.einsum("hqk,khd->qhd", prob, vh).reshape(-1, H)
    return ctx @ p["wo"] + p["bo"]


def reference_forward(raw_model, input_ids, attention_mask_self):
    B, S = input_ids.shape
    x = raw_model["tok_emb"][input_ids] + raw_model["pos_emb"][None, :S, :]
    for p in raw_model["layers"]:
        def block(xb, mb, p=p):
            xb = _ref_ln(xb + _ref_mha(xb, xb, mb, p), p["ln1_g"], p["ln1_b"])
            h = jnp.maximum(xb @ p["w1"] + p["b1"], 0.0)
            y = h @ p["w2"] + p["b2"]
            return _ref_ln(xb + y, p["ln3_g"], p["ln3_b"])
        x = jax.vmap(block)(x, attention_mask_self)
    return x @ raw_model["lm_w"] + raw_model["lm_b"]


# ---------------------------- main ----------------------------
if __name__ == "__main__":
    key = jax.random.PRNGKey(0)
    k_model, k_ids = jax.random.split(key)

    raw_model = init_raw_model(k_model)
    kernel_model = prepare_model_for_kernel(raw_model)   # init-time weight fusion

    input_ids = jax.random.randint(k_ids, (BATCH, SEQ), 0, VOCAB)
    causal = jnp.where(
        jnp.arange(SEQ)[:, None] >= jnp.arange(SEQ)[None, :], 0.0, -1e9
    ).astype(jnp.float32)
    mask_self = jnp.broadcast_to(causal, (BATCH, SEQ, SEQ)).astype(jnp.float32)

    logits = jax.block_until_ready(
        decoder_only_transformer_forward(kernel_model, input_ids, mask_self))
    logits_ref = reference_forward(raw_model, input_ids, mask_self)
    np.testing.assert_allclose(
        np.asarray(logits), np.asarray(logits_ref), rtol=2e-2, atol=2e-2)

    print("KERNEL_OK")
</pallas_src>

<mosaic_0001>
module attributes {stable_mosaic.version = 11 : i64} {
  func.func @_fused_forward_kernel(%arg0: memref<16x1xi32, #tpu.memory_space<vmem>>, %arg1: memref<64x64xf32, #tpu.memory_space<vmem>>, %arg2: memref<128x32xf32, #tpu.memory_space<vmem>>, %arg3: memref<8x32xf32, #tpu.memory_space<vmem>>, %arg4: memref<32x96xf32, #tpu.memory_space<vmem>>, %arg5: memref<1x96xf32, #tpu.memory_space<vmem>>, %arg6: memref<32x32xf32, #tpu.memory_space<vmem>>, %arg7: memref<1x32xf32, #tpu.memory_space<vmem>>, %arg8: memref<2x32xf32, #tpu.memory_space<vmem>>, %arg9: memref<32x64xf32, #tpu.memory_space<vmem>>, %arg10: memref<1x64xf32, #tpu.memory_space<vmem>>, %arg11: memref<64x32xf32, #tpu.memory_space<vmem>>, %arg12: memref<1x32xf32, #tpu.memory_space<vmem>>, %arg13: memref<2x32xf32, #tpu.memory_space<vmem>>, %arg14: memref<32x96xf32, #tpu.memory_space<vmem>>, %arg15: memref<1x96xf32, #tpu.memory_space<vmem>>, %arg16: memref<32x32xf32, #tpu.memory_space<vmem>>, %arg17: memref<1x32xf32, #tpu.memory_space<vmem>>, %arg18: memref<2x32xf32, #tpu.memory_space<vmem>>, %arg19: memref<32x64xf32, #tpu.memory_space<vmem>>, %arg20: memref<1x64xf32, #tpu.memory_space<vmem>>, %arg21: memref<64x32xf32, #tpu.memory_space<vmem>>, %arg22: memref<1x32xf32, #tpu.memory_space<vmem>>, %arg23: memref<2x32xf32, #tpu.memory_space<vmem>>, %arg24: memref<32x128xf32, #tpu.memory_space<vmem>>, %arg25: memref<1x128xf32, #tpu.memory_space<vmem>>, %arg26: memref<16x128xf32, #tpu.memory_space<vmem>>) attributes {dimension_semantics = [], scalar_prefetch = 0 : i64, scratch_operands = 0 : i64, tpu.core_type = #tpu.core_type<tc>} {
    %c0 = arith.constant 0 : index
    %c0_0 = arith.constant 0 : index
    %0 = vector.load %arg0[%c0, %c0_0] : memref<16x1xi32, #tpu.memory_space<vmem>>, vector<16x1xi32>
    %1 = tpu.iota {dimensions = array<i32: 1>} : vector<16x128xi32>
    %2 = vector.broadcast %0 : vector<16x1xi32> to vector<16x128xi32>
    %3 = arith.cmpi eq, %1, %2 : vector<16x128xi32>
    %4 = arith.extui %3 : vector<16x128xi1> to vector<16x128xi32>
    %5 = arith.sitofp %4 : vector<16x128xi32> to vector<16x128xf32>
    %c0_1 = arith.constant 0 : index
    %c0_2 = arith.constant 0 : index
    %6 = vector.load %arg2[%c0_1, %c0_2] : memref<128x32xf32, #tpu.memory_space<vmem>>, vector<128x32xf32>
    %cst = arith.constant dense<0.000000e+00> : vector<16x32xf32>
    %7 = tpu.matmul %5, %6, %cst {dimension_numbers = #tpu.dot_dimension_numbers<[1], [0], [0], [1], [0, 0, 1, 1], [], []>} : vector<16x128xf32>, vector<128x32xf32>, vector<16x32xf32> -> vector<16x32xf32>
    %c0_3 = arith.constant 0 : index
    %c0_4 = arith.constant 0 : index
    %8 = vector.load %arg3[%c0_3, %c0_4] : memref<8x32xf32, #tpu.memory_space<vmem>>, vector<8x32xf32>
    %9 = tpu.concatenate %8, %8 in 0 : vector<8x32xf32>, vector<8x32xf32> -> vector<16x32xf32>
    %10 = arith.addf %7, %9 : vector<16x32xf32>
    %c0_5 = arith.constant 0 : index
    %c0_6 = arith.constant 0 : index
    %11 = vector.load %arg1[%c0_5, %c0_6] : memref<64x64xf32, #tpu.memory_space<vmem>>, vector<64x64xf32>
    %c0_7 = arith.constant 0 : index
    %c0_8 = arith.constant 0 : index
    %12 = vector.load %arg4[%c0_7, %c0_8] : memref<32x96xf32, #tpu.memory_space<vmem>>, vector<32x96xf32>
    %cst_9 = arith.constant dense<0.000000e+00> : vector<16x96xf32>
    %13 = tpu.matmul %10, %12, %cst_9 {dimension_numbers = #tpu.dot_dimension_numbers<[1], [0], [0], [1], [0, 0, 1, 1], [], []>} : vector<16x32xf32>, vector<32x96xf32>, vector<16x96xf32> -> vector<16x96xf32>
    %c0_10 = arith.constant 0 : index
    %c0_11 = arith.constant 0 : index
    %14 = vector.load %arg5[%c0_10, %c0_11] : memref<1x96xf32, #tpu.memory_space<vmem>>, vector<1x96xf32>
    %15 = vector.broadcast %14 : vector<1x96xf32> to vector<16x96xf32>
    %16 = arith.addf %13, %15 : vector<16x96xf32>
    %17 = vector.extract_strided_slice %16 {offsets = [0, 0], sizes = [16, 8], strides = [1, 1]} : vector<16x96xf32> to vector<16x8xf32>
    %18 = vector.extract_strided_slice %16 {offsets = [0, 8], sizes = [16, 8], strides = [1, 1]} : vector<16x96xf32> to vector<16x8xf32>
    %19 = vector.extract_strided_slice %16 {offsets = [0, 16], sizes = [16, 8], strides = [1, 1]} : vector<16x96xf32> to vector<16x8xf32>
    %20 = vector.extract_strided_slice %16 {offsets = [0, 24], sizes = [16, 8], strides = [1, 1]} : vector<16x96xf32> to vector<16x8xf32>
    %21 = tpu.concatenate %17, %18, %19, %20 in 0 : vector<16x8xf32>, vector<16x8xf32>, vector<16x8xf32>, vector<16x8xf32> -> vector<64x8xf32>
    %cst_12 = arith.constant 0.353553385 : f32
    %22 = vector.broadcast %cst_12 : f32 to vector<64x8xf32>
    %23 = arith.mulf %21, %22 : vector<64x8xf32>
    %24 = vector.extract_strided_slice %16 {offsets = [0, 32], sizes = [16, 8], strides = [1, 1]} : vector<16x96xf32> to vector<16x8xf32>
    %25 = vector.extract_strided_slice %16 {offsets = [0, 40], sizes = [16, 8], strides = [1, 1]} : vector<16x96xf32> to vector<16x8xf32>
    %26 = vector.extract_strided_slice %16 {offsets = [0, 48], sizes = [16, 8], strides = [1, 1]} : vector<16x96xf32> to vector<16x8xf32>
    %27 = vector.extract_strided_slice %16 {offsets = [0, 56], sizes = [16, 8], strides = [1, 1]} : vector<16x96xf32> to vector<16x8xf32>
    %28 = tpu.concatenate %24, %25, %26, %27 in 0 : vector<16x8xf32>, vector<16x8xf32>, vector<16x8xf32>, vector<16x8xf32> -> vector<64x8xf32>
    %29 = vector.extract_strided_slice %16 {offsets = [0, 64], sizes = [16, 8], strides = [1, 1]} : vector<16x96xf32> to vector<16x8xf32>
    %30 = vector.extract_strided_slice %16 {offsets = [0, 72], sizes = [16, 8], strides = [1, 1]} : vector<16x96xf32> to vector<16x8xf32>
    %31 = vector.extract_strided_slice %16 {offsets = [0, 80], sizes = [16, 8], strides = [1, 1]} : vector<16x96xf32> to vector<16x8xf32>
    %32 = vector.extract_strided_slice %16 {offsets = [0, 88], sizes = [16, 8], strides = [1, 1]} : vector<16x96xf32> to vector<16x8xf32>
    %33 = tpu.concatenate %29, %30, %31, %32 in 0 : vector<16x8xf32>, vector<16x8xf32>, vector<16x8xf32>, vector<16x8xf32> -> vector<64x8xf32>
    %cst_13 = arith.constant dense<0.000000e+00> : vector<64x64xf32>
    %34 = tpu.matmul %23, %28, %cst_13 {dimension_numbers = #tpu.dot_dimension_numbers<[1], [1], [0], [0], [0, 0, 1, 0], [], []>} : vector<64x8xf32>, vector<64x8xf32>, vector<64x64xf32> -> vector<64x64xf32>
    %35 = arith.addf %34, %11 : vector<64x64xf32>
    %cst_14 = arith.constant dense<0xFF800000> : vector<64xf32>
    %36 = vector.multi_reduction <maximumf>, %35, %cst_14 [1] : vector<64x64xf32> to vector<64xf32>
    %37 = vector.shape_cast %36 : vector<64xf32> to vector<64x1xf32>
    %38 = vector.broadcast %37 : vector<64x1xf32> to vector<64x64xf32>
    %39 = arith.subf %35, %38 : vector<64x64xf32>
    %40 = math.exp %39 : vector<64x64xf32>
    %cst_15 = arith.constant dense<0.000000e+00> : vector<64xf32>
    %41 = vector.multi_reduction <add>, %40, %cst_15 [1] : vector<64x64xf32> to vector<64xf32>
    %42 = vector.shape_cast %41 : vector<64xf32> to vector<64x1xf32>
    %43 = vector.broadcast %42 : vector<64x1xf32> to vector<64x64xf32>
    %44 = arith.divf %40, %43 : vector<64x64xf32>
    %cst_16 = arith.constant dense<0.000000e+00> : vector<64x8xf32>
    %45 = tpu.matmul %44, %33, %cst_16 {dimension_numbers = #tpu.dot_dimension_numbers<[1], [0], [0], [1], [0, 0, 1, 1], [], []>} : vector<64x64xf32>, vector<64x8xf32>, vector<64x8xf32> -> vector<64x8xf32>
    %46 = vector.extract_strided_slice %45 {offsets = [0, 0], sizes = [16, 8], strides = [1, 1]} : vector<64x8xf32> to vector<16x8xf32>
    %47 = vector.extract_strided_slice %45 {offsets = [16, 0], sizes = [16, 8], strides = [1, 1]} : vector<64x8xf32> to vector<16x8xf32>
    %48 = vector.extract_strided_slice %45 {offsets = [32, 0], sizes = [16, 8], strides = [1, 1]} : vector<64x8xf32> to vector<16x8xf32>
    %49 = vector.extract_strided_slice %45 {offsets = [48, 0], sizes = [16, 8], strides = [1, 1]} : vector<64x8xf32> to vector<16x8xf32>
    %50 = tpu.concatenate %46, %47, %48, %49 in 1 : vector<16x8xf32>, vector<16x8xf32>, vector<16x8xf32>, vector<16x8xf32> -> vector<16x32xf32>
    %c0_17 = arith.constant 0 : index
    %c0_18 = arith.constant 0 : index
    %51 = vector.load %arg6[%c0_17, %c0_18] : memref<32x32xf32, #tpu.memory_space<vmem>>, vector<32x32xf32>
    %cst_19 = arith.constant dense<0.000000e+00> : vector<16x32xf32>
    %52 = tpu.matmul %50, %51, %cst_19 {dimension_numbers = #tpu.dot_dimension_numbers<[1], [0], [0], [1], [0, 0, 1, 1], [], []>} : vector<16x32xf32>, vector<32x32xf32>, vector<16x32xf32> -> vector<16x32xf32>
    %c0_20 = arith.constant 0 : index
    %c0_21 = arith.constant 0 : index
    %53 = vector.load %arg7[%c0_20, %c0_21] : memref<1x32xf32, #tpu.memory_space<vmem>>, vector<1x32xf32>
    %54 = vector.broadcast %53 : vector<1x32xf32> to vector<16x32xf32>
    %55 = arith.addf %52, %54 : vector<16x32xf32>
    %56 = arith.addf %10, %55 : vector<16x32xf32>
    %c0_22 = arith.constant 0 : index
    %c0_23 = arith.constant 0 : index
    %57 = vector.load %arg8[%c0_22, %c0_23] : memref<2x32xf32, #tpu.memory_space<vmem>>, vector<1x32xf32>
    %c1 = arith.constant 1 : index
    %c0_24 = arith.constant 0 : index
    %58 = vector.load %arg8[%c1, %c0_24] : memref<2x32xf32, #tpu.memory_space<vmem>>, vector<1x32xf32>
    %cst_25 = arith.constant dense<0.000000e+00> : vector<16xf32>
    %59 = vector.multi_reduction <add>, %56, %cst_25 [1] : vector<16x32xf32> to vector<16xf32>
    %60 = vector.shape_cast %59 : vector<16xf32> to vector<16x1xf32>
    %cst_26 = arith.constant 3.200000e+01 : f32
    %61 = vector.broadcast %cst_26 : f32 to vector<16x1xf32>
    %62 = arith.divf %60, %61 : vector<16x1xf32>
    %63 = vector.broadcast %62 : vector<16x1xf32> to vector<16x32xf32>
    %64 = arith.subf %56, %63 : vector<16x32xf32>
    %65 = arith.mulf %64, %64 : vector<16x32xf32>
    %cst_27 = arith.constant dense<0.000000e+00> : vector<16xf32>
    %66 = vector.multi_reduction <add>, %65, %cst_27 [1] : vector<16x32xf32> to vector<16xf32>
    %67 = vector.shape_cast %66 : vector<16xf32> to vector<16x1xf32>
    %cst_28 = arith.constant 3.200000e+01 : f32
    %68 = vector.broadcast %cst_28 : f32 to vector<16x1xf32>
    %69 = arith.divf %67, %68 : vector<16x1xf32>
    %70 = vector.broadcast %62 : vector<16x1xf32> to vector<16x32xf32>
    %71 = arith.subf %56, %70 : vector<16x32xf32>
    %cst_29 = arith.constant 9.99999974E-6 : f32
    %72 = vector.broadcast %cst_29 : f32 to vector<16x1xf32>
    %73 = arith.addf %69, %72 : vector<16x1xf32>
    %74 = math.rsqrt %73 : vector<16x1xf32>
    %75 = vector.broadcast %74 : vector<16x1xf32> to vector<16x32xf32>
    %76 = arith.mulf %71, %75 : vector<16x32xf32>
    %77 = vector.broadcast %57 : vector<1x32xf32> to vector<16x32xf32>
    %78 = arith.mulf %76, %77 : vector<16x32xf32>
    %79 = vector.broadcast %58 : vector<1x32xf32> to vector<16x32xf32>
    %80 = arith.addf %78, %79 : vector<16x32xf32>
    %c0_30 = arith.constant 0 : index
    %c0_31 = arith.constant 0 : index
    %81 = vector.load %arg9[%c0_30, %c0_31] : memref<32x64xf32, #tpu.memory_space<vmem>>, vector<32x64xf32>
    %cst_32 = arith.constant dense<0.000000e+00> : vector<16x64xf32>
    %82 = tpu.matmul %80, %81, %cst_32 {dimension_numbers = #tpu.dot_dimension_numbers<[1], [0], [0], [1], [0, 0, 1, 1], [], []>} : vector<16x32xf32>, vector<32x64xf32>, vector<16x64xf32> -> vector<16x64xf32>
    %c0_33 = arith.constant 0 : index
    %c0_34 = arith.constant 0 : index
    %83 = vector.load %arg10[%c0_33, %c0_34] : memref<1x64xf32, #tpu.memory_space<vmem>>, vector<1x64xf32>
    %84 = vector.broadcast %83 : vector<1x64xf32> to vector<16x64xf32>
    %85 = arith.addf %82, %84 : vector<16x64xf32>
    %cst_35 = arith.constant 0.000000e+00 : f32
    %86 = vector.broadcast %cst_35 : f32 to vector<16x64xf32>
    %87 = arith.maximumf %85, %86 : vector<16x64xf32>
    %c0_36 = arith.constant 0 : index
    %c0_37 = arith.constant 0 : index
    %88 = vector.load %arg11[%c0_36, %c0_37] : memref<64x32xf32, #tpu.memory_space<vmem>>, vector<64x32xf32>
    %cst_38 = arith.constant dense<0.000000e+00> : vector<16x32xf32>
    %89 = tpu.matmul %87, %88, %cst_38 {dimension_numbers = #tpu.dot_dimension_numbers<[1], [0], [0], [1], [0, 0, 1, 1], [], []>} : vector<16x64xf32>, vector<64x32xf32>, vector<16x32xf32> -> vector<16x32xf32>
    %c0_39 = arith.constant 0 : index
    %c0_40 = arith.constant 0 : index
    %90 = vector.load %arg12[%c0_39, %c0_40] : memref<1x32xf32, #tpu.memory_space<vmem>>, vector<1x32xf32>
    %91 = vector.broadcast %90 : vector<1x32xf32> to vector<16x32xf32>
    %92 = arith.addf %89, %91 : vector<16x32xf32>
    %93 = arith.addf %80, %92 : vector<16x32xf32>
    %c0_41 = arith.constant 0 : index
    %c0_42 = arith.constant 0 : index
    %94 = vector.load %arg13[%c0_41, %c0_42] : memref<2x32xf32, #tpu.memory_space<vmem>>, vector<1x32xf32>
    %c1_43 = arith.constant 1 : index
    %c0_44 = arith.constant 0 : index
    %95 = vector.load %arg13[%c1_43, %c0_44] : memref<2x32xf32, #tpu.memory_space<vmem>>, vector<1x32xf32>
    %cst_45 = arith.constant dense<0.000000e+00> : vector<16xf32>
    %96 = vector.multi_reduction <add>, %93, %cst_45 [1] : vector<16x32xf32> to vector<16xf32>
    %97 = vector.shape_cast %96 : vector<16xf32> to vector<16x1xf32>
    %cst_46 = arith.constant 3.200000e+01 : f32
    %98 = vector.broadcast %cst_46 : f32 to vector<16x1xf32>
    %99 = arith.divf %97, %98 : vector<16x1xf32>
    %100 = vector.broadcast %99 : vector<16x1xf32> to vector<16x32xf32>
    %101 = arith.subf %93, %100 : vector<16x32xf32>
    %102 = arith.mulf %101, %101 : vector<16x32xf32>
    %cst_47 = arith.constant dense<0.000000e+00> : vector<16xf32>
    %103 = vector.multi_reduction <add>, %102, %cst_47 [1] : vector<16x32xf32> to vector<16xf32>
    %104 = vector.shape_cast %103 : vector<16xf32> to vector<16x1xf32>
    %cst_48 = arith.constant 3.200000e+01 : f32
    %105 = vector.broadcast %cst_48 : f32 to vector<16x1xf32>
    %106 = arith.divf %104, %105 : vector<16x1xf32>
    %107 = vector.broadcast %99 : vector<16x1xf32> to vector<16x32xf32>
    %108 = arith.subf %93, %107 : vector<16x32xf32>
    %cst_49 = arith.constant 9.99999974E-6 : f32
    %109 = vector.broadcast %cst_49 : f32 to vector<16x1xf32>
    %110 = arith.addf %106, %109 : vector<16x1xf32>
    %111 = math.rsqrt %110 : vector<16x1xf32>
    %112 = vector.broadcast %111 : vector<16x1xf32> to vector<16x32xf32>
    %113 = arith.mulf %108, %112 : vector<16x32xf32>
    %114 = vector.broadcast %94 : vector<1x32xf32> to vector<16x32xf32>
    %115 = arith.mulf %113, %114 : vector<16x32xf32>
    %116 = vector.broadcast %95 : vector<1x32xf32> to vector<16x32xf32>
    %117 = arith.addf %115, %116 : vector<16x32xf32>
    %c0_50 = arith.constant 0 : index
    %c0_51 = arith.constant 0 : index
    %118 = vector.load %arg14[%c0_50, %c0_51] : memref<32x96xf32, #tpu.memory_space<vmem>>, vector<32x96xf32>
    %cst_52 = arith.constant dense<0.000000e+00> : vector<16x96xf32>
    %119 = tpu.matmul %117, %118, %cst_52 {dimension_numbers = #tpu.dot_dimension_numbers<[1], [0], [0], [1], [0, 0, 1, 1], [], []>} : vector<16x32xf32>, vector<32x96xf32>, vector<16x96xf32> -> vector<16x96xf32>
    %c0_53 = arith.constant 0 : index
    %c0_54 = arith.constant 0 : index
    %120 = vector.load %arg15[%c0_53, %c0_54] : memref<1x96xf32, #tpu.memory_space<vmem>>, vector<1x96xf32>
    %121 = vector.broadcast %120 : vector<1x96xf32> to vector<16x96xf32>
    %122 = arith.addf %119, %121 : vector<16x96xf32>
    %123 = vector.extract_strided_slice %122 {offsets = [0, 0], sizes = [16, 8], strides = [1, 1]} : vector<16x96xf32> to vector<16x8xf32>
    %124 = vector.extract_strided_slice %122 {offsets = [0, 8], sizes = [16, 8], strides = [1, 1]} : vector<16x96xf32> to vector<16x8xf32>
    %125 = vector.extract_strided_slice %122 {offsets = [0, 16], sizes = [16, 8], strides = [1, 1]} : vector<16x96xf32> to vector<16x8xf32>
    %126 = vector.extract_strided_slice %122 {offsets = [0, 24], sizes = [16, 8], strides = [1, 1]} : vector<16x96xf32> to vector<16x8xf32>
    %127 = tpu.concatenate %123, %124, %125, %126 in 0 : vector<16x8xf32>, vector<16x8xf32>, vector<16x8xf32>, vector<16x8xf32> -> vector<64x8xf32>
    %cst_55 = arith.constant 0.353553385 : f32
    %128 = vector.broadcast %cst_55 : f32 to vector<64x8xf32>
    %129 = arith.mulf %127, %128 : vector<64x8xf32>
    %130 = vector.extract_strided_slice %122 {offsets = [0, 32], sizes = [16, 8], strides = [1, 1]} : vector<16x96xf32> to vector<16x8xf32>
    %131 = vector.extract_strided_slice %122 {offsets = [0, 40], sizes = [16, 8], strides = [1, 1]} : vector<16x96xf32> to vector<16x8xf32>
    %132 = vector.extract_strided_slice %122 {offsets = [0, 48], sizes = [16, 8], strides = [1, 1]} : vector<16x96xf32> to vector<16x8xf32>
    %133 = vector.extract_strided_slice %122 {offsets = [0, 56], sizes = [16, 8], strides = [1, 1]} : vector<16x96xf32> to vector<16x8xf32>
    %134 = tpu.concatenate %130, %131, %132, %133 in 0 : vector<16x8xf32>, vector<16x8xf32>, vector<16x8xf32>, vector<16x8xf32> -> vector<64x8xf32>
    %135 = vector.extract_strided_slice %122 {offsets = [0, 64], sizes = [16, 8], strides = [1, 1]} : vector<16x96xf32> to vector<16x8xf32>
    %136 = vector.extract_strided_slice %122 {offsets = [0, 72], sizes = [16, 8], strides = [1, 1]} : vector<16x96xf32> to vector<16x8xf32>
    %137 = vector.extract_strided_slice %122 {offsets = [0, 80], sizes = [16, 8], strides = [1, 1]} : vector<16x96xf32> to vector<16x8xf32>
    %138 = vector.extract_strided_slice %122 {offsets = [0, 88], sizes = [16, 8], strides = [1, 1]} : vector<16x96xf32> to vector<16x8xf32>
    %139 = tpu.concatenate %135, %136, %137, %138 in 0 : vector<16x8xf32>, vector<16x8xf32>, vector<16x8xf32>, vector<16x8xf32> -> vector<64x8xf32>
    %cst_56 = arith.constant dense<0.000000e+00> : vector<64x64xf32>
    %140 = tpu.matmul %129, %134, %cst_56 {dimension_numbers = #tpu.dot_dimension_numbers<[1], [1], [0], [0], [0, 0, 1, 0], [], []>} : vector<64x8xf32>, vector<64x8xf32>, vector<64x64xf32> -> vector<64x64xf32>
    %141 = arith.addf %140, %11 : vector<64x64xf32>
    %cst_57 = arith.constant dense<0xFF800000> : vector<64xf32>
    %142 = vector.multi_reduction <maximumf>, %141, %cst_57 [1] : vector<64x64xf32> to vector<64xf32>
    %143 = vector.shape_cast %142 : vector<64xf32> to vector<64x1xf32>
    %144 = vector.broadcast %143 : vector<64x1xf32> to vector<64x64xf32>
    %145 = arith.subf %141, %144 : vector<64x64xf32>
    %146 = math.exp %145 : vector<64x64xf32>
    %cst_58 = arith.constant dense<0.000000e+00> : vector<64xf32>
    %147 = vector.multi_reduction <add>, %146, %cst_58 [1] : vector<64x64xf32> to vector<64xf32>
    %148 = vector.shape_cast %147 : vector<64xf32> to vector<64x1xf32>
    %149 = vector.broadcast %148 : vector<64x1xf32> to vector<64x64xf32>
    %150 = arith.divf %146, %149 : vector<64x64xf32>
    %cst_59 = arith.constant dense<0.000000e+00> : vector<64x8xf32>
    %151 = tpu.matmul %150, %139, %cst_59 {dimension_numbers = #tpu.dot_dimension_numbers<[1], [0], [0], [1], [0, 0, 1, 1], [], []>} : vector<64x64xf32>, vector<64x8xf32>, vector<64x8xf32> -> vector<64x8xf32>
    %152 = vector.extract_strided_slice %151 {offsets = [0, 0], sizes = [16, 8], strides = [1, 1]} : vector<64x8xf32> to vector<16x8xf32>
    %153 = vector.extract_strided_slice %151 {offsets = [16, 0], sizes = [16, 8], strides = [1, 1]} : vector<64x8xf32> to vector<16x8xf32>
    %154 = vector.extract_strided_slice %151 {offsets = [32, 0], sizes = [16, 8], strides = [1, 1]} : vector<64x8xf32> to vector<16x8xf32>
    %155 = vector.extract_strided_slice %151 {offsets = [48, 0], sizes = [16, 8], strides = [1, 1]} : vector<64x8xf32> to vector<16x8xf32>
    %156 = tpu.concatenate %152, %153, %154, %155 in 1 : vector<16x8xf32>, vector<16x8xf32>, vector<16x8xf32>, vector<16x8xf32> -> vector<16x32xf32>
    %c0_60 = arith.constant 0 : index
    %c0_61 = arith.constant 0 : index
    %157 = vector.load %arg16[%c0_60, %c0_61] : memref<32x32xf32, #tpu.memory_space<vmem>>, vector<32x32xf32>
    %cst_62 = arith.constant dense<0.000000e+00> : vector<16x32xf32>
    %158 = tpu.matmul %156, %157, %cst_62 {dimension_numbers = #tpu.dot_dimension_numbers<[1], [0], [0], [1], [0, 0, 1, 1], [], []>} : vector<16x32xf32>, vector<32x32xf32>, vector<16x32xf32> -> vector<16x32xf32>
    %c0_63 = arith.constant 0 : index
    %c0_64 = arith.constant 0 : index
    %159 = vector.load %arg17[%c0_63, %c0_64] : memref<1x32xf32, #tpu.memory_space<vmem>>, vector<1x32xf32>
    %160 = vector.broadcast %159 : vector<1x32xf32> to vector<16x32xf32>
    %161 = arith.addf %158, %160 : vector<16x32xf32>
    %162 = arith.addf %117, %161 : vector<16x32xf32>
    %c0_65 = arith.constant 0 : index
    %c0_66 = arith.constant 0 : index
    %163 = vector.load %arg18[%c0_65, %c0_66] : memref<2x32xf32, #tpu.memory_space<vmem>>, vector<1x32xf32>
    %c1_67 = arith.constant 1 : index
    %c0_68 = arith.constant 0 : index
    %164 = vector.load %arg18[%c1_67, %c0_68] : memref<2x32xf32, #tpu.memory_space<vmem>>, vector<1x32xf32>
    %cst_69 = arith.constant dense<0.000000e+00> : vector<16xf32>
    %165 = vector.multi_reduction <add>, %162, %cst_69 [1] : vector<16x32xf32> to vector<16xf32>
    %166 = vector.shape_cast %165 : vector<16xf32> to vector<16x1xf32>
    %cst_70 = arith.constant 3.200000e+01 : f32
    %167 = vector.broadcast %cst_70 : f32 to vector<16x1xf32>
    %168 = arith.divf %166, %167 : vector<16x1xf32>
    %169 = vector.broadcast %168 : vector<16x1xf32> to vector<16x32xf32>
    %170 = arith.subf %162, %169 : vector<16x32xf32>
    %171 = arith.mulf %170, %170 : vector<16x32xf32>
    %cst_71 = arith.constant dense<0.000000e+00> : vector<16xf32>
    %172 = vector.multi_reduction <add>, %171, %cst_71 [1] : vector<16x32xf32> to vector<16xf32>
    %173 = vector.shape_cast %172 : vector<16xf32> to vector<16x1xf32>
    %cst_72 = arith.constant 3.200000e+01 : f32
    %174 = vector.broadcast %cst_72 : f32 to vector<16x1xf32>
    %175 = arith.divf %173, %174 : vector<16x1xf32>
    %176 = vector.broadcast %168 : vector<16x1xf32> to vector<16x32xf32>
    %177 = arith.subf %162, %176 : vector<16x32xf32>
    %cst_73 = arith.constant 9.99999974E-6 : f32
    %178 = vector.broadcast %cst_73 : f32 to vector<16x1xf32>
    %179 = arith.addf %175, %178 : vector<16x1xf32>
    %180 = math.rsqrt %179 : vector<16x1xf32>
    %181 = vector.broadcast %180 : vector<16x1xf32> to vector<16x32xf32>
    %182 = arith.mulf %177, %181 : vector<16x32xf32>
    %183 = vector.broadcast %163 : vector<1x32xf32> to vector<16x32xf32>
    %184 = arith.mulf %182, %183 : vector<16x32xf32>
    %185 = vector.broadcast %164 : vector<1x32xf32> to vector<16x32xf32>
    %186 = arith.addf %184, %185 : vector<16x32xf32>
    %c0_74 = arith.constant 0 : index
    %c0_75 = arith.constant 0 : index
    %187 = vector.load %arg19[%c0_74, %c0_75] : memref<32x64xf32, #tpu.memory_space<vmem>>, vector<32x64xf32>
    %cst_76 = arith.constant dense<0.000000e+00> : vector<16x64xf32>
    %188 = tpu.matmul %186, %187, %cst_76 {dimension_numbers = #tpu.dot_dimension_numbers<[1], [0], [0], [1], [0, 0, 1, 1], [], []>} : vector<16x32xf32>, vector<32x64xf32>, vector<16x64xf32> -> vector<16x64xf32>
    %c0_77 = arith.constant 0 : index
    %c0_78 = arith.constant 0 : index
    %189 = vector.load %arg20[%c0_77, %c0_78] : memref<1x64xf32, #tpu.memory_space<vmem>>, vector<1x64xf32>
    %190 = vector.broadcast %189 : vector<1x64xf32> to vector<16x64xf32>
    %191 = arith.addf %188, %190 : vector<16x64xf32>
    %cst_79 = arith.constant 0.000000e+00 : f32
    %192 = vector.broadcast %cst_79 : f32 to vector<16x64xf32>
    %193 = arith.maximumf %191, %192 : vector<16x64xf32>
    %c0_80 = arith.constant 0 : index
    %c0_81 = arith.constant 0 : index
    %194 = vector.load %arg21[%c0_80, %c0_81] : memref<64x32xf32, #tpu.memory_space<vmem>>, vector<64x32xf32>
    %cst_82 = arith.constant dense<0.000000e+00> : vector<16x32xf32>
    %195 = tpu.matmul %193, %194, %cst_82 {dimension_numbers = #tpu.dot_dimension_numbers<[1], [0], [0], [1], [0, 0, 1, 1], [], []>} : vector<16x64xf32>, vector<64x32xf32>, vector<16x32xf32> -> vector<16x32xf32>
    %c0_83 = arith.constant 0 : index
    %c0_84 = arith.constant 0 : index
    %196 = vector.load %arg22[%c0_83, %c0_84] : memref<1x32xf32, #tpu.memory_space<vmem>>, vector<1x32xf32>
    %197 = vector.broadcast %196 : vector<1x32xf32> to vector<16x32xf32>
    %198 = arith.addf %195, %197 : vector<16x32xf32>
    %199 = arith.addf %186, %198 : vector<16x32xf32>
    %c0_85 = arith.constant 0 : index
    %c0_86 = arith.constant 0 : index
    %200 = vector.load %arg23[%c0_85, %c0_86] : memref<2x32xf32, #tpu.memory_space<vmem>>, vector<1x32xf32>
    %c1_87 = arith.constant 1 : index
    %c0_88 = arith.constant 0 : index
    %201 = vector.load %arg23[%c1_87, %c0_88] : memref<2x32xf32, #tpu.memory_space<vmem>>, vector<1x32xf32>
    %cst_89 = arith.constant dense<0.000000e+00> : vector<16xf32>
    %202 = vector.multi_reduction <add>, %199, %cst_89 [1] : vector<16x32xf32> to vector<16xf32>
    %203 = vector.shape_cast %202 : vector<16xf32> to vector<16x1xf32>
    %cst_90 = arith.constant 3.200000e+01 : f32
    %204 = vector.broadcast %cst_90 : f32 to vector<16x1xf32>
    %205 = arith.divf %203, %204 : vector<16x1xf32>
    %206 = vector.broadcast %205 : vector<16x1xf32> to vector<16x32xf32>
    %207 = arith.subf %199, %206 : vector<16x32xf32>
    %208 = arith.mulf %207, %207 : vector<16x32xf32>
    %cst_91 = arith.constant dense<0.000000e+00> : vector<16xf32>
    %209 = vector.multi_reduction <add>, %208, %cst_91 [1] : vector<16x32xf32> to vector<16xf32>
    %210 = vector.shape_cast %209 : vector<16xf32> to vector<16x1xf32>
    %cst_92 = arith.constant 3.200000e+01 : f32
    %211 = vector.broadcast %cst_92 : f32 to vector<16x1xf32>
    %212 = arith.divf %210, %211 : vector<16x1xf32>
    %213 = vector.broadcast %205 : vector<16x1xf32> to vector<16x32xf32>
    %214 = arith.subf %199, %213 : vector<16x32xf32>
    %cst_93 = arith.constant 9.99999974E-6 : f32
    %215 = vector.broadcast %cst_93 : f32 to vector<16x1xf32>
    %216 = arith.addf %212, %215 : vector<16x1xf32>
    %217 = math.rsqrt %216 : vector<16x1xf32>
    %218 = vector.broadcast %217 : vector<16x1xf32> to vector<16x32xf32>
    %219 = arith.mulf %214, %218 : vector<16x32xf32>
    %220 = vector.broadcast %200 : vector<1x32xf32> to vector<16x32xf32>
    %221 = arith.mulf %219, %220 : vector<16x32xf32>
    %222 = vector.broadcast %201 : vector<1x32xf32> to vector<16x32xf32>
    %223 = arith.addf %221, %222 : vector<16x32xf32>
    %c0_94 = arith.constant 0 : index
    %c0_95 = arith.constant 0 : index
    %224 = vector.load %arg24[%c0_94, %c0_95] : memref<32x128xf32, #tpu.memory_space<vmem>>, vector<32x128xf32>
    %cst_96 = arith.constant dense<0.000000e+00> : vector<16x128xf32>
    %225 = tpu.matmul %223, %224, %cst_96 {dimension_numbers = #tpu.dot_dimension_numbers<[1], [0], [0], [1], [0, 0, 1, 1], [], []>} : vector<16x32xf32>, vector<32x128xf32>, vector<16x128xf32> -> vector<16x128xf32>
    %c0_97 = arith.constant 0 : index
    %c0_98 = arith.constant 0 : index
    %226 = vector.load %arg25[%c0_97, %c0_98] : memref<1x128xf32, #tpu.memory_space<vmem>>, vector<1x128xf32>
    %227 = vector.broadcast %226 : vector<1x128xf32> to vector<16x128xf32>
    %228 = arith.addf %225, %227 : vector<16x128xf32>
    %c0_99 = arith.constant 0 : index
    %c0_100 = arith.constant 0 : index
    %229 = vector.load %arg26[%c0_99, %c0_100] : memref<16x128xf32, #tpu.memory_space<vmem>>, vector<16x128xf32>
    tpu.vector_store %arg26[%c0_99, %c0_100], %228 {strides = array<i32>} : memref<16x128xf32, #tpu.memory_space<vmem>>, vector<16x128xf32>,
    return
  }
}

</mosaic_0001>

<llo_original>
// kernel: decoder_only_transformer_forward.1
$region0: #{decoder_only_transformer_forward.1}
  #allocation0 [shape = 'u32[]', space=smem, size = 0x4, offset = 0x4, fixed_abs, tag = 'smem constant byte address 0x4 - core index']
  #allocation1 [shape = 'u32[144,128]{1,0:T(1,128)}', space=vmem, size = 0x12000, scoped, tag = 'internal scratch']
  %s0 = inlined_call_operand.vmem [shape: s32[16,1], index: 0, kind: input, shape index: {}]
  %s1 = inlined_call_operand.vmem [shape: f32[64,64], index: 1, kind: input, shape index: {}]
  %s2 = inlined_call_operand.vmem [shape: f32[128,32], index: 2, kind: input, shape index: {}]
  %s3 = inlined_call_operand.vmem [shape: f32[8,32], index: 3, kind: input, shape index: {}]
  %s4 = inlined_call_operand.vmem [shape: f32[32,96], index: 4, kind: input, shape index: {}]
  %s5 = inlined_call_operand.vmem [shape: f32[1,96], index: 5, kind: input, shape index: {}]
  %s6 = inlined_call_operand.vmem [shape: f32[32,32], index: 6, kind: input, shape index: {}]
  %s7 = inlined_call_operand.vmem [shape: f32[1,32], index: 7, kind: input, shape index: {}]
  %s8 = inlined_call_operand.vmem [shape: f32[2,32], index: 8, kind: input, shape index: {}]
  %s9 = inlined_call_operand.vmem [shape: f32[32,64], index: 9, kind: input, shape index: {}]
  %s10 = inlined_call_operand.vmem [shape: f32[1,64], index: 10, kind: input, shape index: {}]
  %s11 = inlined_call_operand.vmem [shape: f32[64,32], index: 11, kind: input, shape index: {}]
  %s12 = inlined_call_operand.vmem [shape: f32[1,32], index: 12, kind: input, shape index: {}]
  %s13 = inlined_call_operand.vmem [shape: f32[2,32], index: 13, kind: input, shape index: {}]
  %s14 = inlined_call_operand.vmem [shape: f32[32,96], index: 14, kind: input, shape index: {}]
  %s15 = inlined_call_operand.vmem [shape: f32[1,96], index: 15, kind: input, shape index: {}]
  %s16 = inlined_call_operand.vmem [shape: f32[32,32], index: 16, kind: input, shape index: {}]
  %s17 = inlined_call_operand.vmem [shape: f32[1,32], index: 17, kind: input, shape index: {}]
  %s18 = inlined_call_operand.vmem [shape: f32[2,32], index: 18, kind: input, shape index: {}]
  %s19 = inlined_call_operand.vmem [shape: f32[32,64], index: 19, kind: input, shape index: {}]
  %s20 = inlined_call_operand.vmem [shape: f32[1,64], index: 20, kind: input, shape index: {}]
  %s21 = inlined_call_operand.vmem [shape: f32[64,32], index: 21, kind: input, shape index: {}]
  %s22 = inlined_call_operand.vmem [shape: f32[1,32], index: 22, kind: input, shape index: {}]
  %s23 = inlined_call_operand.vmem [shape: f32[2,32], index: 23, kind: input, shape index: {}]
  %s24 = inlined_call_operand.vmem [shape: f32[32,128], index: 24, kind: input, shape index: {}]
  %s25 = inlined_call_operand.vmem [shape: f32[1,128], index: 25, kind: input, shape index: {}]
  %s26 = inlined_call_operand.hbm [shape: f32[16,128], index: 26, kind: output, shape index: {}]
  %s27 = sld [smem:[#allocation0]]
  $region114: #{decoder_only_transformer_forward.1} parent=0
    _
  %s29 = ssub.s32 1, %s27
  %s30 = scalar_select 0, %s29, %s27
  $region1: #{decoder_only_transformer_forward.1} parent=0
    #allocation2 [shape = 'u8[8192]{0}', space=vmem, size = 0x2000, scoped, tag = 'output window, operand 0, single buffered']
    #allocation3 [shape = 's32[1]{0}', space=sflag, size = 0x4, scoped, tag = 'scoped memory for decoder_only_transformer_forward.1']
    %31 = vsyncpa [#allocation3], 0
    // Predicated region
    $region2: #{decoder_only_transformer_forward.1} parent=1 // pred_check
      _
    $region3: #{decoder_only_transformer_forward.1} parent=1 // pred_check_branch
      %33 = sbr.rel (0) target = $region5
    $region4: #{decoder_only_transformer_forward.1} parent=1 // pred_region
      _
    $region5: #{decoder_only_transformer_forward.1} parent=1 // pred_fallthru
      _
    // Predicated region
    $region6: #{decoder_only_transformer_forward.1} parent=1 // pred_check
      _
    $region7: #{decoder_only_transformer_forward.1} parent=1 // pred_check_branch
      %35 = sbr.rel (0) target = $region9
    $region8: #{decoder_only_transformer_forward.1} parent=1 // pred_region
      _
    $region9: #{decoder_only_transformer_forward.1} parent=1 // pred_fallthru
      _
    // Predicated region
    $region10: #{decoder_only_transformer_forward.1} parent=1 // pred_check
      _
    $region11: #{decoder_only_transformer_forward.1} parent=1 // pred_check_branch
      %37 = sbr.rel (0) target = $region13
    $region12: #{decoder_only_transformer_forward.1} parent=1 // pred_region
      _
    $region13: #{decoder_only_transformer_forward.1} parent=1 // pred_fallthru
      _
    // Predicated region
    $region14: #{decoder_only_transformer_forward.1} parent=1 // pred_check
      _
    $region15: #{decoder_only_transformer_forward.1} parent=1 // pred_check_branch
      %39 = sbr.rel (0) target = $region17
    $region16: #{decoder_only_transformer_forward.1} parent=1 // pred_region
      _
    $region17: #{decoder_only_transformer_forward.1} parent=1 // pred_fallthru
      _
    // Predicated region
    $region18: #{decoder_only_transformer_forward.1} parent=1 // pred_check
      _
    $region19: #{decoder_only_transformer_forward.1} parent=1 // pred_check_branch
      %41 = sbr.rel (0) target = $region21
    $region20: #{decoder_only_transformer_forward.1} parent=1 // pred_region
      _
    $region21: #{decoder_only_transformer_forward.1} parent=1 // pred_fallthru
      _
    // Predicated region
    $region22: #{decoder_only_transformer_forward.1} parent=1 // pred_check
      _
    $region23: #{decoder_only_transformer_forward.1} parent=1 // pred_check_branch
      %43 = sbr.rel (0) target = $region25
    $region24: #{decoder_only_transformer_forward.1} parent=1 // pred_region
      _
    $region25: #{decoder_only_transformer_forward.1} parent=1 // pred_fallthru
      _
    // Predicated region
    $region26: #{decoder_only_transformer_forward.1} parent=1 // pred_check
      _
    $region27: #{decoder_only_transformer_forward.1} parent=1 // pred_check_branch
      %45 = sbr.rel (0) target = $region29
    $region28: #{decoder_only_transformer_forward.1} parent=1 // pred_region
      _
    $region29: #{decoder_only_transformer_forward.1} parent=1 // pred_fallthru
      _
    // Predicated region
    $region30: #{decoder_only_transformer_forward.1} parent=1 // pred_check
      _
    $region31: #{decoder_only_transformer_forward.1} parent=1 // pred_check_branch
      %47 = sbr.rel (0) target = $region33
    $region32: #{decoder_only_transformer_forward.1} parent=1 // pred_region
      _
    $region33: #{decoder_only_transformer_forward.1} parent=1 // pred_fallthru
      _
    // Predicated region
    $region34: #{decoder_only_transformer_forward.1} parent=1 // pred_check
      _
    $region35: #{decoder_only_transformer_forward.1} parent=1 // pred_check_branch
      %49 = sbr.rel (0) target = $region37
    $region36: #{decoder_only_transformer_forward.1} parent=1 // pred_region
      _
    $region37: #{decoder_only_transformer_forward.1} parent=1 // pred_fallthru
      _
    // Predicated region
    $region38: #{decoder_only_transformer_forward.1} parent=1 // pred_check
      _
    $region39: #{decoder_only_transformer_forward.1} parent=1 // pred_check_branch
      %51 = sbr.rel (0) target = $region41
    $region40: #{decoder_only_transformer_forward.1} parent=1 // pred_region
      _
    $region41: #{decoder_only_transformer_forward.1} parent=1 // pred_fallthru
      _
    // Predicated region
    $region42: #{decoder_only_transformer_forward.1} parent=1 // pred_check
      _
    $region43: #{decoder_only_transformer_forward.1} parent=1 // pred_check_branch
      %53 = sbr.rel (0) target = $region45
    $region44: #{decoder_only_transformer_forward.1} parent=1 // pred_region
      _
    $region45: #{decoder_only_transformer_forward.1} parent=1 // pred_fallthru
      _
    // Predicated region
    $region46: #{decoder_only_transformer_forward.1} parent=1 // pred_check
      _
    $region47: #{decoder_only_transformer_forward.1} parent=1 // pred_check_branch
      %55 = sbr.rel (0) target = $region49
    $region48: #{decoder_only_transformer_forward.1} parent=1 // pred_region
      _
    $region49: #{decoder_only_transformer_forward.1} parent=1 // pred_fallthru
      _
    // Predicated region
    $region50: #{decoder_only_transformer_forward.1} parent=1 // pred_check
      _
    $region51: #{decoder_only_transformer_forward.1} parent=1 // pred_check_branch
      %57 = sbr.rel (0) target = $region53
    $region52: #{decoder_only_transformer_forward.1} parent=1 // pred_region
      _
    $region53: #{decoder_only_transformer_forward.1} parent=1 // pred_fallthru
      _
    // Predicated region
    $region54: #{decoder_only_transformer_forward.1} parent=1 // pred_check
      _
    $region55: #{decoder_only_transformer_forward.1} parent=1 // pred_check_branch
      %59 = sbr.rel (0) target = $region57
    $region56: #{decoder_only_transformer_forward.1} parent=1 // pred_region
      _
    $region57: #{decoder_only_transformer_forward.1} parent=1 // pred_fallthru
      _
    // Predicated region
    $region58: #{decoder_only_transformer_forward.1} parent=1 // pred_check
      _
    $region59: #{decoder_only_transformer_forward.1} parent=1 // pred_check_branch
      %61 = sbr.rel (0) target = $region61
    $region60: #{decoder_only_transformer_forward.1} parent=1 // pred_region
      _
    $region61: #{decoder_only_transformer_forward.1} parent=1 // pred_fallthru
      _
    // Predicated region
    $region62: #{decoder_only_transformer_forward.1} parent=1 // pred_check
      _
    $region63: #{decoder_only_transformer_forward.1} parent=1 // pred_check_branch
      %63 = sbr.rel (0) target = $region65
    $region64: #{decoder_only_transformer_forward.1} parent=1 // pred_region
      _
    $region65: #{decoder_only_transformer_forward.1} parent=1 // pred_fallthru
      _
    // Predicated region
    $region66: #{decoder_only_transformer_forward.1} parent=1 // pred_check
      _
    $region67: #{decoder_only_transformer_forward.1} parent=1 // pred_check_branch
      %65 = sbr.rel (0) target = $region69
    $region68: #{decoder_only_transformer_forward.1} parent=1 // pred_region
      _
    $region69: #{decoder_only_transformer_forward.1} parent=1 // pred_fallthru
      _
    // Predicated region
    $region70: #{decoder_only_transformer_forward.1} parent=1 // pred_check
      _
    $region71: #{decoder_only_transformer_forward.1} parent=1 // pred_check_branch
      %67 = sbr.rel (0) target = $region73
    $region72: #{decoder_only_transformer_forward.1} parent=1 // pred_region
      _
    $region73: #{decoder_only_transformer_forward.1} parent=1 // pred_fallthru
      _
    // Predicated region
    $region74: #{decoder_only_transformer_forward.1} parent=1 // pred_check
      _
    $region75: #{decoder_only_transformer_forward.1} parent=1 // pred_check_branch
      %69 = sbr.rel (0) target = $region77
    $region76: #{decoder_only_transformer_forward.1} parent=1 // pred_region
      _
    $region77: #{decoder_only_transformer_forward.1} parent=1 // pred_fallthru
      _
    // Predicated region
    $region78: #{decoder_only_transformer_forward.1} parent=1 // pred_check
      _
    $region79: #{decoder_only_transformer_forward.1} parent=1 // pred_check_branch
      %71 = sbr.rel (0) target = $region81
    $region80: #{decoder_only_transformer_forward.1} parent=1 // pred_region
      _
    $region81: #{decoder_only_transformer_forward.1} parent=1 // pred_fallthru
      _
    // Predicated region
    $region82: #{decoder_only_transformer_forward.1} parent=1 // pred_check
      _
    $region83: #{decoder_only_transformer_forward.1} parent=1 // pred_check_branch
      %73 = sbr.rel (0) target = $region85
    $region84: #{decoder_only_transformer_forward.1} parent=1 // pred_region
      _
    $region85: #{decoder_only_transformer_forward.1} parent=1 // pred_fallthru
      _
    // Predicated region
    $region86: #{decoder_only_transformer_forward.1} parent=1 // pred_check
      _
    $region87: #{decoder_only_transformer_forward.1} parent=1 // pred_check_branch
      %75 = sbr.rel (0) target = $region89
    $region88: #{decoder_only_transformer_forward.1} parent=1 // pred_region
      _
    $region89: #{decoder_only_transformer_forward.1} parent=1 // pred_fallthru
      _
    // Predicated region
    $region90: #{decoder_only_transformer_forward.1} parent=1 // pred_check
      _
    $region91: #{decoder_only_transformer_forward.1} parent=1 // pred_check_branch
      %77 = sbr.rel (0) target = $region93
    $region92: #{decoder_only_transformer_forward.1} parent=1 // pred_region
      _
    $region93: #{decoder_only_transformer_forward.1} parent=1 // pred_fallthru
      _
    // Predicated region
    $region94: #{decoder_only_transformer_forward.1} parent=1 // pred_check
      _
    $region95: #{decoder_only_transformer_forward.1} parent=1 // pred_check_branch
      %79 = sbr.rel (0) target = $region97
    $region96: #{decoder_only_transformer_forward.1} parent=1 // pred_region
      _
    $region97: #{decoder_only_transformer_forward.1} parent=1 // pred_fallthru
      _
    // Predicated region
    $region98: #{decoder_only_transformer_forward.1} parent=1 // pred_check
      _
    $region99: #{decoder_only_transformer_forward.1} parent=1 // pred_check_branch
      %81 = sbr.rel (0) target = $region101
    $region100: #{decoder_only_transformer_forward.1} parent=1 // pred_region
      _
    $region101: #{decoder_only_transformer_forward.1} parent=1 // pred_fallthru
      _
    // Predicated region
    $region102: #{decoder_only_transformer_forward.1} parent=1 // pred_check
      _
    $region103: #{decoder_only_transformer_forward.1} parent=1 // pred_check_branch
      %83 = sbr.rel (0) target = $region105
    $region104: #{decoder_only_transformer_forward.1} parent=1 // pred_region
      _
    $region105: #{decoder_only_transformer_forward.1} parent=1 // pred_fallthru
      _
    %v84 = vld [vmem:[%s0] sm:$0xff]
    %v85 = vld [vmem:[%s0 + $0x8] sm:$0xff]
    %v86 = vlaneseq
    %v87 = vand.u32 %v86, 127
    %88 = vset.pattern.permute.xlu0 0
    %89 = vperm.xlu0 %88, %v84
    %v90 = vpop.permute.xlu0 %89
    %91 = vset.pattern.permute.xlu0 0
    %92 = vperm.xlu0 %91, %v85
    %v93 = vpop.permute.xlu0 %92
    %vm94 = vcmp.eq.s32.totalorder %v87, %v90
    %vm95 = vcmp.eq.s32.totalorder %v87, %v93
    %v96 = vsel %vm94, 1, 0
    %v97 = vsel %vm95, 1, 0
    %v98 = vcvt.s32.f32 %v96
    %v99 = vcvt.s32.f32 %v97
    %v100 = vld [vmem:[%s2] sm:$0xff]
    %v101 = vld [vmem:[%s2 + $0x8] sm:$0xff]
    %v102 = vld [vmem:[%s2 + $0x10] sm:$0xff]
    %v103 = vld [vmem:[%s2 + $0x18] sm:$0xff]
    %v104 = vld [vmem:[%s2 + $0x20] sm:$0xff]
    %v105 = vld [vmem:[%s2 + $0x28] sm:$0xff]
    %v106 = vld [vmem:[%s2 + $0x30] sm:$0xff]
    %v107 = vld [vmem:[%s2 + $0x38] sm:$0xff]
    %v108 = vld [vmem:[%s2 + $0x40] sm:$0xff]
    %v109 = vld [vmem:[%s2 + $0x48] sm:$0xff]
    %v110 = vld [vmem:[%s2 + $0x50] sm:$0xff]
    %v111 = vld [vmem:[%s2 + $0x58] sm:$0xff]
    %v112 = vld [vmem:[%s2 + $0x60] sm:$0xff]
    %v113 = vld [vmem:[%s2 + $0x68] sm:$0xff]
    %v114 = vld [vmem:[%s2 + $0x70] sm:$0xff]
    %v115 = vld [vmem:[%s2 + $0x78] sm:$0xff]
    %v116 = vld [vmem:[%s3] sm:$0xff]
    %117 = vmatprep.subr.mxu0 0.0
    %118 = vmatpush1.msra.mxu0 %v100
    %119 = vmatprep.subr.mxu0 0.0
    %120 = vmatpush1.msra.mxu0 %v101
    %121 = vmatprep.subr.mxu0 0.0
    %122 = vmatpush1.msra.mxu0 %v102
    %123 = vmatprep.subr.mxu0 0.0
    %124 = vmatpush1.msra.mxu0 %v103
    %125 = vmatprep.subr.mxu0 0.0
    %126 = vmatpush1.msra.mxu0 %v104
    %127 = vmatprep.subr.mxu0 0.0
    %128 = vmatpush1.msra.mxu0 %v105
    %129 = vmatprep.subr.mxu0 0.0
    %130 = vmatpush1.msra.mxu0 %v106
    %131 = vmatprep.subr.mxu0 0.0
    %132 = vmatpush1.msra.mxu0 %v107
    %133 = vmatprep.subr.mxu0 0.0
    %134 = vmatpush1.msra.mxu0 %v108
    %135 = vmatprep.subr.mxu0 0.0
    %136 = vmatpush1.msra.mxu0 %v109
    %137 = vmatprep.subr.mxu0 0.0
    %138 = vmatpush1.msra.mxu0 %v110
    %139 = vmatprep.subr.mxu0 0.0
    %140 = vmatpush1.msra.mxu0 %v111
    %141 = vmatprep.subr.mxu0 0.0
    %142 = vmatpush1.msra.mxu0 %v112
    %143 = vmatprep.subr.mxu0 0.0
    %144 = vmatpush1.msra.mxu0 %v113
    %145 = vmatprep.subr.mxu0 0.0
    %146 = vmatpush1.msra.mxu0 %v114
    %147 = vmatprep.subr.mxu0 0.0
    %148 = vmatpush1.msra.mxu0 %v115
    %149 = vmatprep.subr.mxu0 0.0
    %150 = vmatpush1.msra.mxu0 0.0
    %151 = vmatprep.subr.mxu0 0.0
    %152 = vmatpush1.msra.mxu0 0.0
    %153 = vmatprep.subr.mxu0 0.0
    %154 = vmatpush1.msra.mxu0 0.0
    %155 = vmatprep.subr.mxu0 0.0
    %156 = vmatpush1.msra.mxu0 0.0
    %157 = vmatprep.subr.mxu0 0.0
    %158 = vmatpush1.msra.mxu0 0.0
    %159 = vmatprep.subr.mxu0 0.0
    %160 = vmatpush1.msra.mxu0 0.0
    %161 = vmatprep.subr.mxu0 0.0
    %162 = vmatpush1.msra.mxu0 0.0
    %163 = vmatprep.subr.mxu0 0.0
    %164 = vmatpush1.msra.mxu0 0.0
    %165 = vmatprep.subr.mxu0 0.0
    %166 = vmatpush1.msra.mxu0 0.0
    %167 = vmatprep.subr.mxu0 0.0
    %168 = vmatpush1.msra.mxu0 0.0
    %169 = vmatprep.subr.mxu0 0.0
    %170 = vmatpush1.msra.mxu0 0.0
    %171 = vmatprep.subr.mxu0 0.0
    %172 = vmatpush1.msra.mxu0 0.0
    %173 = vmatprep.subr.mxu0 0.0
    %174 = vmatpush1.msra.mxu0 0.0
    %175 = vmatprep.subr.mxu0 0.0
    %176 = vmatpush1.msra.mxu0 0.0
    %177 = vmatprep.subr.mxu0 0.0
    %178 = vmatpush1.msra.mxu0 0.0
    %179 = vmatprep.subr.mxu0 0.0
    %180 = vmatpush1.msra.mxu0 0.0
    %181 = vmatprep.mubr.f32.mxu0 0.0
    %182 = vmatmul.mubr.f32.gmra.mrb[0].mxu0 %v98
    %v183 = vpop.f32.mrb[0].mxu0
    %v184 = vadd.f32 %v116, %v183
    %v185 = vpop.f32.mrb[0].mxu0
    %186 = vmatprep.mubr.f32.mxu0 0.0
    %187 = vmatmul.mubr.f32.gmra.mrb[0].mxu0 %v99
    %v188 = vpop.f32.mrb[0].mxu0
    %v189 = vadd.f32 %v116, %v188
    %v190 = vpop.f32.mrb[0].mxu0
    %191 = vdwg.mxu0
    %v192 = vld [vmem:[%s1] sm:$0xff]
    %v193 = vld [vmem:[%s1 + $0x8] sm:$0xff]
    %v194 = vld [vmem:[%s1 + $0x10] sm:$0xff]
    %v195 = vld [vmem:[%s1 + $0x18] sm:$0xff]
    %v196 = vld [vmem:[%s1 + $0x20] sm:$0xff]
    %v197 = vld [vmem:[%s1 + $0x28] sm:$0xff]
    %v198 = vld [vmem:[%s1 + $0x30] sm:$0xff]
    %v199 = vld [vmem:[%s1 + $0x38] sm:$0xff]
    %v200 = vld [vmem:[%s4] sm:$0xff]
    %v201 = vld [vmem:[%s4 + $0x8] sm:$0xff]
    %v202 = vld [vmem:[%s4 + $0x10] sm:$0xff]
    %v203 = vld [vmem:[%s4 + $0x18] sm:$0xff]
    %v204 = vld [vmem:[%s5] sm:$0x1]
    %v206 = vlaneseq
    %v207 = vshrl.u32 %v206, 7
    %v208 = vsub.s32 0, %v207
    %v209 = vrot.slane %v204, %v208
    %vm211 = vcmask 261120
    %v213 = vsel %vm211, %v184, 0
    %v216 = vsel %vm211, %v189, 0
    %218 = vmatprep.subr.mxu0 0.0
    %219 = vmatpush1.msra.mxu0 %v200
    %220 = vmatprep.subr.mxu0 0.0
    %221 = vmatpush1.msra.mxu0 %v201
    %222 = vmatprep.subr.mxu0 0.0
    %223 = vmatpush1.msra.mxu0 %v202
    %224 = vmatprep.subr.mxu0 0.0
    %225 = vmatpush1.msra.mxu0 %v203
    %226 = vmatprep.subr.mxu0 0.0
    %227 = vmatpush1.msra.mxu0 0.0
    %228 = vmatprep.subr.mxu0 0.0
    %229 = vmatpush1.msra.mxu0 0.0
    %230 = vmatprep.subr.mxu0 0.0
    %231 = vmatpush1.msra.mxu0 0.0
    %232 = vmatprep.subr.mxu0 0.0
    %233 = vmatpush1.msra.mxu0 0.0
    %234 = vmatprep.subr.mxu0 0.0
    %235 = vmatpush1.msra.mxu0 0.0
    %236 = vmatprep.subr.mxu0 0.0
    %237 = vmatpush1.msra.mxu0 0.0
    %238 = vmatprep.subr.mxu0 0.0
    %239 = vmatpush1.msra.mxu0 0.0
    %240 = vmatprep.subr.mxu0 0.0
    %241 = vmatpush1.msra.mxu0 0.0
    %242 = vmatprep.subr.mxu0 0.0
    %243 = vmatpush1.msra.mxu0 0.0
    %244 = vmatprep.subr.mxu0 0.0
    %245 = vmatpush1.msra.mxu0 0.0
    %246 = vmatprep.subr.mxu0 0.0
    %247 = vmatpush1.msra.mxu0 0.0
    %248 = vmatprep.subr.mxu0 0.0
    %249 = vmatpush1.msra.mxu0 0.0
    %250 = vmatprep.subr.mxu0 0.0
    %251 = vmatpush1.msra.mxu0 0.0
    %252 = vmatprep.subr.mxu0 0.0
    %253 = vmatpush1.msra.mxu0 0.0
    %254 = vmatprep.subr.mxu0 0.0
    %255 = vmatpush1.msra.mxu0 0.0
    %256 = vmatprep.subr.mxu0 0.0
    %257 = vmatpush1.msra.mxu0 0.0
    %258 = vmatprep.subr.mxu0 0.0
    %259 = vmatpush1.msra.mxu0 0.0
    %260 = vmatprep.subr.mxu0 0.0
    %261 = vmatpush1.msra.mxu0 0.0
    %262 = vmatprep.subr.mxu0 0.0
    %263 = vmatpush1.msra.mxu0 0.0
    %264 = vmatprep.subr.mxu0 0.0
    %265 = vmatpush1.msra.mxu0 0.0
    %266 = vmatprep.subr.mxu0 0.0
    %267 = vmatpush1.msra.mxu0 0.0
    %268 = vmatprep.subr.mxu0 0.0
    %269 = vmatpush1.msra.mxu0 0.0
    %270 = vmatprep.subr.mxu0 0.0
    %271 = vmatpush1.msra.mxu0 0.0
    %272 = vmatprep.subr.mxu0 0.0
    %273 = vmatpush1.msra.mxu0 0.0
    %274 = vmatprep.subr.mxu0 0.0
    %275 = vmatpush1.msra.mxu0 0.0
    %276 = vmatprep.subr.mxu0 0.0
    %277 = vmatpush1.msra.mxu0 0.0
    %278 = vmatprep.subr.mxu0 0.0
    %279 = vmatpush1.msra.mxu0 0.0
    %280 = vmatprep.subr.mxu0 0.0
    %281 = vmatpush1.msra.mxu0 0.0
    %282 = vmatprep.mubr.f32.mxu0 0.0
    %283 = vmatmul.mubr.f32.gmra.mrb[0].mxu0 %v213
    %v284 = vpop.f32.mrb[0].mxu0
    %v285 = vadd.f32 %v209, %v284
    %v286 = vpop.f32.mrb[0].mxu0
    %287 = vmatprep.mubr.f32.mxu0 0.0
    %288 = vmatmul.mubr.f32.gmra.mrb[0].mxu0 %v216
    %v289 = vpop.f32.mrb[0].mxu0
    %v290 = vadd.f32 %v209, %v289
    %v291 = vpop.f32.mrb[0].mxu0
    %292 = vdwg.mxu0
    %295 = vrot.lane.b32.xlu0 %v285, 120
    %v296 = vpop.permute.xlu0 %295
    %297 = vrot.lane.b32.xlu0 %v290, 120
    %v298 = vpop.permute.xlu0 %297
    %301 = vrot.lane.b32.xlu0 %v285, 112
    %v302 = vpop.permute.xlu0 %301
    %303 = vrot.lane.b32.xlu0 %v290, 112
    %v304 = vpop.permute.xlu0 %303
    %307 = vrot.lane.b32.xlu0 %v285, 104
    %v308 = vpop.permute.xlu0 %307
    %309 = vrot.lane.b32.xlu0 %v290, 104
    %v310 = vpop.permute.xlu0 %309
    %v313 = vmul.f32 %v285, 0.35355338
    %v314 = vmul.f32 %v290, 0.35355338
    %v315 = vmul.f32 %v296, 0.35355338
    %v316 = vmul.f32 %v298, 0.35355338
    %v317 = vmul.f32 %v302, 0.35355338
    %v318 = vmul.f32 %v304, 0.35355338
    %v319 = vmul.f32 %v308, 0.35355338
    %v320 = vmul.f32 %v310, 0.35355338
    %321 = vrot.lane.b32.xlu0 %v285, 96
    %v322 = vpop.permute.xlu0 %321
    %323 = vrot.lane.b32.xlu0 %v290, 96
    %v324 = vpop.permute.xlu0 %323
    %325 = vrot.lane.b32.xlu0 %v296, 96
    %v326 = vpop.permute.xlu0 %325
    %327 = vrot.lane.b32.xlu0 %v298, 96
    %v328 = vpop.permute.xlu0 %327
    %329 = vrot.lane.b32.xlu0 %v302, 96
    %v330 = vpop.permute.xlu0 %329
    %331 = vrot.lane.b32.xlu0 %v304, 96
    %v332 = vpop.permute.xlu0 %331
    %333 = vrot.lane.b32.xlu0 %v308, 96
    %v334 = vpop.permute.xlu0 %333
    %335 = vrot.lane.b32.xlu0 %v310, 96
    %v336 = vpop.permute.xlu0 %335
    %vm337 = vcmask 64512
    %v339 = vsel %vm337, %v313, 0
    %v342 = vsel %vm337, %v314, 0
    %v345 = vsel %vm337, %v315, 0
    %v348 = vsel %vm337, %v316, 0
    %v351 = vsel %vm337, %v317, 0
    %v354 = vsel %vm337, %v318, 0
    %v357 = vsel %vm337, %v319, 0
    %v360 = vsel %vm337, %v320, 0
    %v362 = vsel %vm337, %v322, 0
    %v364 = vsel %vm337, %v324, 0
    %v366 = vsel %vm337, %v326, 0
    %v368 = vsel %vm337, %v328, 0
    %v370 = vsel %vm337, %v330, 0
    %v372 = vsel %vm337, %v332, 0
    %v374 = vsel %vm337, %v334, 0
    %v376 = vsel %vm337, %v336, 0
    %378 = vmatprep.subr.mxu0 0.0
    %379 = vmatpush1.xpose.msra.mxu0 %v362
    %380 = vmatprep.subr.mxu0 0.0
    %381 = vmatpush1.xpose.msra.mxu0 %v364
    %382 = vmatprep.subr.mxu0 0.0
    %383 = vmatpush1.xpose.msra.mxu0 %v366
    %384 = vmatprep.subr.mxu0 0.0
    %385 = vmatpush1.xpose.msra.mxu0 %v368
    %386 = vmatprep.subr.mxu0 0.0
    %387 = vmatpush1.xpose.msra.mxu0 %v370
    %388 = vmatprep.subr.mxu0 0.0
    %389 = vmatpush1.xpose.msra.mxu0 %v372
    %390 = vmatprep.subr.mxu0 0.0
    %391 = vmatpush1.xpose.msra.mxu0 %v374
    %392 = vmatprep.subr.mxu0 0.0
    %393 = vmatpush1.xpose.msra.mxu0 %v376
    %394 = vmatprep.subr.mxu0 0.0
    %395 = vmatpush1.xpose.msra.mxu0 0.0
    %396 = vmatprep.subr.mxu0 0.0
    %397 = vmatpush1.xpose.msra.mxu0 0.0
    %398 = vmatprep.subr.mxu0 0.0
    %399 = vmatpush1.xpose.msra.mxu0 0.0
    %400 = vmatprep.subr.mxu0 0.0
    %401 = vmatpush1.xpose.msra.mxu0 0.0
    %402 = vmatprep.subr.mxu0 0.0
    %403 = vmatpush1.xpose.msra.mxu0 0.0
    %404 = vmatprep.subr.mxu0 0.0
    %405 = vmatpush1.xpose.msra.mxu0 0.0
    %406 = vmatprep.subr.mxu0 0.0
    %407 = vmatpush1.xpose.msra.mxu0 0.0
    %408 = vmatprep.subr.mxu0 0.0
    %409 = vmatpush1.xpose.msra.mxu0 0.0
    %410 = vmatprep.subr.mxu0 0.0
    %411 = vmatpush1.xpose.msra.mxu0 0.0
    %412 = vmatprep.subr.mxu0 0.0
    %413 = vmatpush1.xpose.msra.mxu0 0.0
    %414 = vmatprep.subr.mxu0 0.0
    %415 = vmatpush1.xpose.msra.mxu0 0.0
    %416 = vmatprep.subr.mxu0 0.0
    %417 = vmatpush1.xpose.msra.mxu0 0.0
    %418 = vmatprep.subr.mxu0 0.0
    %419 = vmatpush1.xpose.msra.mxu0 0.0
    %420 = vmatprep.subr.mxu0 0.0
    %421 = vmatpush1.xpose.msra.mxu0 0.0
    %422 = vmatprep.subr.mxu0 0.0
    %423 = vmatpush1.xpose.msra.mxu0 0.0
    %424 = vmatprep.subr.mxu0 0.0
    %425 = vmatpush1.xpose.msra.mxu0 0.0
    %426 = vmatprep.subr.mxu0 0.0
    %427 = vmatpush1.xpose.msra.mxu0 0.0
    %428 = vmatprep.subr.mxu0 0.0
    %429 = vmatpush1.xpose.msra.mxu0 0.0
    %430 = vmatprep.subr.mxu0 0.0
    %431 = vmatpush1.xpose.msra.mxu0 0.0
    %432 = vmatprep.subr.mxu0 0.0
    %433 = vmatpush1.xpose.msra.mxu0 0.0
    %434 = vmatprep.subr.mxu0 0.0
    %435 = vmatpush1.xpose.msra.mxu0 0.0
    %436 = vmatprep.subr.mxu0 0.0
    %437 = vmatpush1.xpose.msra.mxu0 0.0
    %438 = vmatprep.subr.mxu0 0.0
    %439 = vmatpush1.xpose.msra.mxu0 0.0
    %440 = vmatprep.subr.mxu0 0.0
    %441 = vmatpush1.xpose.msra.mxu0 0.0
    %442 = vmatprep.mubr.f32.mxu0 0.0
    %443 = vmatmul.mubr.f32.gmra.mrb[0].mxu0 %v339
    %v444 = vpop.f32.mrb[0].mxu0
    %v445 = vadd.f32 %v192, %v444
    %v446 = vpop.f32.mrb[0].mxu0
    %447 = vmatprep.mubr.f32.mxu0 0.0
    %448 = vmatmul.mubr.f32.gmra.mrb[0].mxu0 %v342
    %v449 = vpop.f32.mrb[0].mxu0
    %v450 = vadd.f32 %v193, %v449
    %v451 = vpop.f32.mrb[0].mxu0
    %452 = vmatprep.mubr.f32.mxu0 0.0
    %453 = vmatmul.mubr.f32.gmra.mrb[0].mxu0 %v345
    %v454 = vpop.f32.mrb[0].mxu0
    %v455 = vadd.f32 %v194, %v454
    %v456 = vpop.f32.mrb[0].mxu0
    %457 = vmatprep.mubr.f32.mxu0 0.0
    %458 = vmatmul.mubr.f32.gmra.mrb[0].mxu0 %v348
    %v459 = vpop.f32.mrb[0].mxu0
    %v460 = vadd.f32 %v195, %v459
    %v461 = vpop.f32.mrb[0].mxu0
    %462 = vmatprep.mubr.f32.mxu0 0.0
    %463 = vmatmul.mubr.f32.gmra.mrb[0].mxu0 %v351
    %v464 = vpop.f32.mrb[0].mxu0
    %v465 = vadd.f32 %v196, %v464
    %v466 = vpop.f32.mrb[0].mxu0
    %467 = vmatprep.mubr.f32.mxu0 0.0
    %468 = vmatmul.mubr.f32.gmra.mrb[0].mxu0 %v354
    %v469 = vpop.f32.mrb[0].mxu0
    %v470 = vadd.f32 %v197, %v469
    %v471 = vpop.f32.mrb[0].mxu0
    %472 = vmatprep.mubr.f32.mxu0 0.0
    %473 = vmatmul.mubr.f32.gmra.mrb[0].mxu0 %v357
    %v474 = vpop.f32.mrb[0].mxu0
    %v475 = vadd.f32 %v198, %v474
    %v476 = vpop.f32.mrb[0].mxu0
    %477 = vmatprep.mubr.f32.mxu0 0.0
    %478 = vmatmul.mubr.f32.gmra.mrb[0].mxu0 %v360
    %v479 = vpop.f32.mrb[0].mxu0
    %v480 = vadd.f32 %v199, %v479
    %v481 = vpop.f32.mrb[0].mxu0
    %482 = vdwg.mxu0
    %vm483 = vcmask 523264
    %v484 = vsel %vm483, %v445, -inf
    %485 = vmax.xlane.f32.xlu0 %v484
    %v486 = vpop.xlane.xlu0 %485
    %v487 = vsel %vm483, %v450, -inf
    %488 = vmax.xlane.f32.xlu0 %v487
    %v489 = vpop.xlane.xlu0 %488
    %v490 = vsel %vm483, %v455, -inf
    %491 = vmax.xlane.f32.xlu0 %v490
    %v492 = vpop.xlane.xlu0 %491
    %v493 = vsel %vm483, %v460, -inf
    %494 = vmax.xlane.f32.xlu0 %v493
    %v495 = vpop.xlane.xlu0 %494
    %v496 = vsel %vm483, %v465, -inf
    %497 = vmax.xlane.f32.xlu0 %v496
    %v498 = vpop.xlane.xlu0 %497
    %v499 = vsel %vm483, %v470, -inf
    %500 = vmax.xlane.f32.xlu0 %v499
    %v501 = vpop.xlane.xlu0 %500
    %v502 = vsel %vm483, %v475, -inf
    %503 = vmax.xlane.f32.xlu0 %v502
    %v504 = vpop.xlane.xlu0 %503
    %v505 = vsel %vm483, %v480, -inf
    %506 = vmax.xlane.f32.xlu0 %v505
    %v507 = vpop.xlane.xlu0 %506
    %v508 = vsub.f32 %v445, %v486
    %v509 = vsub.f32 %v450, %v489
    %v510 = vsub.f32 %v455, %v492
    %v511 = vsub.f32 %v460, %v495
    %v512 = vsub.f32 %v465, %v498
    %v513 = vsub.f32 %v470, %v501
    %v514 = vsub.f32 %v475, %v504
    %v515 = vsub.f32 %v480, %v507
    %v516 = vmul.f32 %v508, 1.442695
    %v517 = vpow.pop %v516
    %v518 = vmul.f32 %v509, 1.442695
    %v519 = vpow.pop %v518
    %v520 = vmul.f32 %v510, 1.442695
    %v521 = vpow.pop %v520
    %v522 = vmul.f32 %v511, 1.442695
    %v523 = vpow.pop %v522
    %v524 = vmul.f32 %v512, 1.442695
    %v525 = vpow.pop %v524
    %v526 = vmul.f32 %v513, 1.442695
    %v527 = vpow.pop %v526
    %v528 = vmul.f32 %v514, 1.442695
    %v529 = vpow.pop %v528
    %v530 = vmul.f32 %v515, 1.442695
    %v531 = vpow.pop %v530
    %v532 = vsel %vm483, %v517, 0.0
    %533 = vadd.xlane.f32.xlu0 %v532
    %v534 = vpop.xlane.xlu0 %533
    %v535 = vsel %vm483, %v519, 0.0
    %536 = vadd.xlane.f32.xlu0 %v535
    %v537 = vpop.xlane.xlu0 %536
    %v538 = vsel %vm483, %v521, 0.0
    %539 = vadd.xlane.f32.xlu0 %v538
    %v540 = vpop.xlane.xlu0 %539
    %v541 = vsel %vm483, %v523, 0.0
    %542 = vadd.xlane.f32.xlu0 %v541
    %v543 = vpop.xlane.xlu0 %542
    %v544 = vsel %vm483, %v525, 0.0
    %545 = vadd.xlane.f32.xlu0 %v544
    %v546 = vpop.xlane.xlu0 %545
    %v547 = vsel %vm483, %v527, 0.0
    %548 = vadd.xlane.f32.xlu0 %v547
    %v549 = vpop.xlane.xlu0 %548
    %v550 = vsel %vm483, %v529, 0.0
    %551 = vadd.xlane.f32.xlu0 %v550
    %v552 = vpop.xlane.xlu0 %551
    %v553 = vsel %vm483, %v531, 0.0
    %554 = vadd.xlane.f32.xlu0 %v553
    %v555 = vpop.xlane.xlu0 %554
    %v556 = vrcp.pop %v534
    %v557 = vmul.f32 %v517, %v556
    %v558 = vrcp.pop %v537
    %v559 = vmul.f32 %v519, %v558
    %v560 = vrcp.pop %v540
    %v561 = vmul.f32 %v521, %v560
    %v562 = vrcp.pop %v543
    %v563 = vmul.f32 %v523, %v562
    %v564 = vrcp.pop %v546
    %v565 = vmul.f32 %v525, %v564
    %v566 = vrcp.pop %v549
    %v567 = vmul.f32 %v527, %v566
    %v568 = vrcp.pop %v552
    %v569 = vmul.f32 %v529, %v568
    %v570 = vrcp.pop %v555
    %v571 = vmul.f32 %v531, %v570
    %572 = vrot.lane.b32.xlu0 %v285, 64
    %v573 = vpop.permute.xlu0 %572
    %574 = vrot.lane.b32.xlu0 %v290, 64
    %v575 = vpop.permute.xlu0 %574
    %576 = vrot.lane.b32.xlu0 %v296, 64
    %v577 = vpop.permute.xlu0 %576
    %578 = vrot.lane.b32.xlu0 %v298, 64
    %v579 = vpop.permute.xlu0 %578
    %580 = vrot.lane.b32.xlu0 %v302, 64
    %v581 = vpop.permute.xlu0 %580
    %582 = vrot.lane.b32.xlu0 %v304, 64
    %v583 = vpop.permute.xlu0 %582
    %584 = vrot.lane.b32.xlu0 %v308, 64
    %v585 = vpop.permute.xlu0 %584
    %586 = vrot.lane.b32.xlu0 %v310, 64
    %v587 = vpop.permute.xlu0 %586
    %v597 = vsel %vm483, %v557, 0
    %v600 = vsel %vm483, %v559, 0
    %v603 = vsel %vm483, %v561, 0
    %v606 = vsel %vm483, %v563, 0
    %v609 = vsel %vm483, %v565, 0
    %v612 = vsel %vm483, %v567, 0
    %v615 = vsel %vm483, %v569, 0
    %v618 = vsel %vm483, %v571, 0
    %620 = vmatprep.subr.mxu0 0.0
    %621 = vmatpush1.msra.mxu0 %v573
    %622 = vmatprep.subr.mxu0 0.0
    %623 = vmatpush1.msra.mxu0 %v575
    %624 = vmatprep.subr.mxu0 0.0
    %625 = vmatpush1.msra.mxu0 %v577
    %626 = vmatprep.subr.mxu0 0.0
    %627 = vmatpush1.msra.mxu0 %v579
    %628 = vmatprep.subr.mxu0 0.0
    %629 = vmatpush1.msra.mxu0 %v581
    %630 = vmatprep.subr.mxu0 0.0
    %631 = vmatpush1.msra.mxu0 %v583
    %632 = vmatprep.subr.mxu0 0.0
    %633 = vmatpush1.msra.mxu0 %v585
    %634 = vmatprep.subr.mxu0 0.0
    %635 = vmatpush1.msra.mxu0 %v587
    %636 = vmatprep.subr.mxu0 0.0
    %637 = vmatpush1.msra.mxu0 0.0
    %638 = vmatprep.subr.mxu0 0.0
    %639 = vmatpush1.msra.mxu0 0.0
    %640 = vmatprep.subr.mxu0 0.0
    %641 = vmatpush1.msra.mxu0 0.0
    %642 = vmatprep.subr.mxu0 0.0
    %643 = vmatpush1.msra.mxu0 0.0
    %644 = vmatprep.subr.mxu0 0.0
    %645 = vmatpush1.msra.mxu0 0.0
    %646 = vmatprep.subr.mxu0 0.0
    %647 = vmatpush1.msra.mxu0 0.0
    %648 = vmatprep.subr.mxu0 0.0
    %649 = vmatpush1.msra.mxu0 0.0
    %650 = vmatprep.subr.mxu0 0.0
    %651 = vmatpush1.msra.mxu0 0.0
    %652 = vmatprep.subr.mxu0 0.0
    %653 = vmatpush1.msra.mxu0 0.0
    %654 = vmatprep.subr.mxu0 0.0
    %655 = vmatpush1.msra.mxu0 0.0
    %656 = vmatprep.subr.mxu0 0.0
    %657 = vmatpush1.msra.mxu0 0.0
    %658 = vmatprep.subr.mxu0 0.0
    %659 = vmatpush1.msra.mxu0 0.0
    %660 = vmatprep.subr.mxu0 0.0
    %661 = vmatpush1.msra.mxu0 0.0
    %662 = vmatprep.subr.mxu0 0.0
    %663 = vmatpush1.msra.mxu0 0.0
    %664 = vmatprep.subr.mxu0 0.0
    %665 = vmatpush1.msra.mxu0 0.0
    %666 = vmatprep.subr.mxu0 0.0
    %667 = vmatpush1.msra.mxu0 0.0
    %668 = vmatprep.subr.mxu0 0.0
    %669 = vmatpush1.msra.mxu0 0.0
    %670 = vmatprep.subr.mxu0 0.0
    %671 = vmatpush1.msra.mxu0 0.0
    %672 = vmatprep.subr.mxu0 0.0
    %673 = vmatpush1.msra.mxu0 0.0
    %674 = vmatprep.subr.mxu0 0.0
    %675 = vmatpush1.msra.mxu0 0.0
    %676 = vmatprep.subr.mxu0 0.0
    %677 = vmatpush1.msra.mxu0 0.0
    %678 = vmatprep.subr.mxu0 0.0
    %679 = vmatpush1.msra.mxu0 0.0
    %680 = vmatprep.subr.mxu0 0.0
    %681 = vmatpush1.msra.mxu0 0.0
    %682 = vmatprep.subr.mxu0 0.0
    %683 = vmatpush1.msra.mxu0 0.0
    %684 = vmatprep.mubr.f32.mxu0 0.0
    %685 = vmatmul.mubr.f32.gmra.mrb[0].mxu0 %v597
    %v686 = vpop.f32.mrb[0].mxu0
    %v687 = vadd.f32 0.0, %v686
    %v688 = vpop.f32.mrb[0].mxu0
    %689 = vmatprep.mubr.f32.mxu0 0.0
    %690 = vmatmul.mubr.f32.gmra.mrb[0].mxu0 %v600
    %v691 = vpop.f32.mrb[0].mxu0
    %v692 = vadd.f32 0.0, %v691
    %v693 = vpop.f32.mrb[0].mxu0
    %694 = vmatprep.mubr.f32.mxu0 0.0
    %695 = vmatmul.mubr.f32.gmra.mrb[0].mxu0 %v603
    %v696 = vpop.f32.mrb[0].mxu0
    %v697 = vadd.f32 0.0, %v696
    %v698 = vpop.f32.mrb[0].mxu0
    %699 = vmatprep.mubr.f32.mxu0 0.0
    %700 = vmatmul.mubr.f32.gmra.mrb[0].mxu0 %v606
    %v701 = vpop.f32.mrb[0].mxu0
    %v702 = vadd.f32 0.0, %v701
    %v703 = vpop.f32.mrb[0].mxu0
    %704 = vmatprep.mubr.f32.mxu0 0.0
    %705 = vmatmul.mubr.f32.gmra.mrb[0].mxu0 %v609
    %v706 = vpop.f32.mrb[0].mxu0
    %v707 = vadd.f32 0.0, %v706
    %v708 = vpop.f32.mrb[0].mxu0
    %709 = vmatprep.mubr.f32.mxu0 0.0
    %710 = vmatmul.mubr.f32.gmra.mrb[0].mxu0 %v612
    %v711 = vpop.f32.mrb[0].mxu0
    %v712 = vadd.f32 0.0, %v711
    %v713 = vpop.f32.mrb[0].mxu0
    %714 = vmatprep.mubr.f32.mxu0 0.0
    %715 = vmatmul.mubr.f32.gmra.mrb[0].mxu0 %v615
    %v716 = vpop.f32.mrb[0].mxu0
    %v717 = vadd.f32 0.0, %v716
    %v718 = vpop.f32.mrb[0].mxu0
    %719 = vmatprep.mubr.f32.mxu0 0.0
    %720 = vmatmul.mubr.f32.gmra.mrb[0].mxu0 %v618
    %v721 = vpop.f32.mrb[0].mxu0
    %v722 = vadd.f32 0.0, %v721
    %v723 = vpop.f32.mrb[0].mxu0
    %724 = vdwg.mxu0
    %727 = vrot.lane.b32.xlu0 %v697, 8
    %v728 = vpop.permute.xlu0 %727
    %729 = vrot.lane.b32.xlu0 %v702, 8
    %v730 = vpop.permute.xlu0 %729
    %735 = vrot.lane.b32.xlu0 %v707, 16
    %v736 = vpop.permute.xlu0 %735
    %737 = vrot.lane.b32.xlu0 %v712, 16
    %v738 = vpop.permute.xlu0 %737
    %743 = vrot.lane.b32.xlu0 %v717, 24
    %v744 = vpop.permute.xlu0 %743
    %745 = vrot.lane.b32.xlu0 %v722, 24
    %v746 = vpop.permute.xlu0 %745
    %v749 = vsel %vm337, %v687, %v728
    %v750 = vsel %vm337, %v692, %v730
    %vm751 = vcmask 130048
    %v752 = vsel %vm751, %v749, %v736
    %v753 = vsel %vm751, %v750, %v738
    %vm754 = vcmask 195584
    %v755 = vsel %vm754, %v752, %v744
    %v756 = vsel %vm754, %v753, %v746
    %v757 = vld [vmem:[%s6] sm:$0xff]
    %v758 = vld [vmem:[%s6 + $0x8] sm:$0xff]
    %v759 = vld [vmem:[%s6 + $0x10] sm:$0xff]
    %v760 = vld [vmem:[%s6 + $0x18] sm:$0xff]
    %v761 = vld [vmem:[%s7] sm:$0x1]
    %v763 = vlaneseq
    %v764 = vshrl.u32 %v763, 7
    %v765 = vsub.s32 0, %v764
    %v766 = vrot.slane %v761, %v765
    %v769 = vsel %vm211, %v755, 0
    %v772 = vsel %vm211, %v756, 0
    %774 = vmatprep.subr.mxu0 0.0
    %775 = vmatpush1.msra.mxu0 %v757
    %776 = vmatprep.subr.mxu0 0.0
    %777 = vmatpush1.msra.mxu0 %v758
    %778 = vmatprep.subr.mxu0 0.0
    %779 = vmatpush1.msra.mxu0 %v759
    %780 = vmatprep.subr.mxu0 0.0
    %781 = vmatpush1.msra.mxu0 %v760
    %782 = vmatprep.subr.mxu0 0.0
    %783 = vmatpush1.msra.mxu0 0.0
    %784 = vmatprep.subr.mxu0 0.0
    %785 = vmatpush1.msra.mxu0 0.0
    %786 = vmatprep.subr.mxu0 0.0
    %787 = vmatpush1.msra.mxu0 0.0
    %788 = vmatprep.subr.mxu0 0.0
    %789 = vmatpush1.msra.mxu0 0.0
    %790 = vmatprep.subr.mxu0 0.0
    %791 = vmatpush1.msra.mxu0 0.0
    %792 = vmatprep.subr.mxu0 0.0
    %793 = vmatpush1.msra.mxu0 0.0
    %794 = vmatprep.subr.mxu0 0.0
    %795 = vmatpush1.msra.mxu0 0.0
    %796 = vmatprep.subr.mxu0 0.0
    %797 = vmatpush1.msra.mxu0 0.0
    %798 = vmatprep.subr.mxu0 0.0
    %799 = vmatpush1.msra.mxu0 0.0
    %800 = vmatprep.subr.mxu0 0.0
    %801 = vmatpush1.msra.mxu0 0.0
    %802 = vmatprep.subr.mxu0 0.0
    %803 = vmatpush1.msra.mxu0 0.0
    %804 = vmatprep.subr.mxu0 0.0
    %805 = vmatpush1.msra.mxu0 0.0
    %806 = vmatprep.subr.mxu0 0.0
    %807 = vmatpush1.msra.mxu0 0.0
    %808 = vmatprep.subr.mxu0 0.0
    %809 = vmatpush1.msra.mxu0 0.0
    %810 = vmatprep.subr.mxu0 0.0
    %811 = vmatpush1.msra.mxu0 0.0
    %812 = vmatprep.subr.mxu0 0.0
    %813 = vmatpush1.msra.mxu0 0.0
    %814 = vmatprep.subr.mxu0 0.0
    %815 = vmatpush1.msra.mxu0 0.0
    %816 = vmatprep.subr.mxu0 0.0
    %817 = vmatpush1.msra.mxu0 0.0
    %818 = vmatprep.subr.mxu0 0.0
    %819 = vmatpush1.msra.mxu0 0.0
    %820 = vmatprep.subr.mxu0 0.0
    %821 = vmatpush1.msra.mxu0 0.0
    %822 = vmatprep.subr.mxu0 0.0
    %823 = vmatpush1.msra.mxu0 0.0
    %824 = vmatprep.subr.mxu0 0.0
    %825 = vmatpush1.msra.mxu0 0.0
    %826 = vmatprep.subr.mxu0 0.0
    %827 = vmatpush1.msra.mxu0 0.0
    %828 = vmatprep.subr.mxu0 0.0
    %829 = vmatpush1.msra.mxu0 0.0
    %830 = vmatprep.subr.mxu0 0.0
    %831 = vmatpush1.msra.mxu0 0.0
    %832 = vmatprep.subr.mxu0 0.0
    %833 = vmatpush1.msra.mxu0 0.0
    %834 = vmatprep.subr.mxu0 0.0
    %835 = vmatpush1.msra.mxu0 0.0
    %836 = vmatprep.subr.mxu0 0.0
    %837 = vmatpush1.msra.mxu0 0.0
    %838 = vmatprep.mubr.f32.mxu0 0.0
    %839 = vmatmul.mubr.f32.gmra.mrb[0].mxu0 %v769
    %v840 = vpop.f32.mrb[0].mxu0
    %v841 = vadd.f32 %v766, %v840
    %v842 = vpop.f32.mrb[0].mxu0
    %843 = vmatprep.mubr.f32.mxu0 0.0
    %844 = vmatmul.mubr.f32.gmra.mrb[0].mxu0 %v772
    %v845 = vpop.f32.mrb[0].mxu0
    %v846 = vadd.f32 %v766, %v845
    %v847 = vpop.f32.mrb[0].mxu0
    %848 = vdwg.mxu0
    %v849 = vadd.f32 %v184, %v841
    %v850 = vadd.f32 %v189, %v846
    %v851 = vld [vmem:[%s8] sm:$0x1]
    %v852 = vld [vmem:[%s8 + $0x1] sm:$0x1]
    %v853 = vsel %vm211, %v849, 0.0
    %854 = vadd.xlane.f32.xlu0 %v853
    %v855 = vpop.xlane.xlu0 %854
    %v856 = vsel %vm211, %v850, 0.0
    %857 = vadd.xlane.f32.xlu0 %v856
    %v858 = vpop.xlane.xlu0 %857
    %v859 = vrcp.pop 32.0
    %v860 = vmul.f32 %v855, %v859
    %v861 = vmul.f32 %v858, %v859
    %v862 = vsub.f32 %v849, %v860
    %v863 = vsub.f32 %v850, %v861
    %v864 = vmul.f32 %v862, %v862
    %v865 = vmul.f32 %v863, %v863
    %v866 = vsel %vm211, %v864, 0.0
    %867 = vadd.xlane.f32.xlu0 %v866
    %v868 = vpop.xlane.xlu0 %867
    %v869 = vsel %vm211, %v865, 0.0
    %870 = vadd.xlane.f32.xlu0 %v869
    %v871 = vpop.xlane.xlu0 %870
    %v872 = vmul.f32 %v868, %v859
    %v873 = vmul.f32 %v871, %v859
    %v874 = vadd.f32 %v872, 1e-05
    %v875 = vadd.f32 %v873, 1e-05
    %v876 = vrsqrt.pop %v874
    %v877 = vrsqrt.pop %v875
    %v878 = vmul.f32 %v862, %v876
    %v879 = vmul.f32 %v863, %v877
    %v880 = vlaneseq
    %v881 = vshrl.u32 %v880, 7
    %v882 = vsub.s32 0, %v881
    %v883 = vrot.slane %v851, %v882
    %v884 = vmul.f32 %v878, %v883
    %v885 = vmul.f32 %v879, %v883
    %v886 = vlaneseq
    %v887 = vshrl.u32 %v886, 7
    %v888 = vsub.s32 0, %v887
    %v889 = vrot.slane %v852, %v888
    %v890 = vadd.f32 %v884, %v889
    %v891 = vadd.f32 %v885, %v889
    %v892 = vld [vmem:[%s9] sm:$0xff]
    %v893 = vld [vmem:[%s9 + $0x8] sm:$0xff]
    %v894 = vld [vmem:[%s9 + $0x10] sm:$0xff]
    %v895 = vld [vmem:[%s9 + $0x18] sm:$0xff]
    %v896 = vld [vmem:[%s10] sm:$0x1]
    %v898 = vlaneseq
    %v899 = vshrl.u32 %v898, 7
    %v900 = vsub.s32 0, %v899
    %v901 = vrot.slane %v896, %v900
    %v904 = vsel %vm211, %v890, 0
    %v907 = vsel %vm211, %v891, 0
    %909 = vmatprep.subr.mxu0 0.0
    %910 = vmatpush1.msra.mxu0 %v892
    %911 = vmatprep.subr.mxu0 0.0
    %912 = vmatpush1.msra.mxu0 %v893
    %913 = vmatprep.subr.mxu0 0.0
    %914 = vmatpush1.msra.mxu0 %v894
    %915 = vmatprep.subr.mxu0 0.0
    %916 = vmatpush1.msra.mxu0 %v895
    %917 = vmatprep.subr.mxu0 0.0
    %918 = vmatpush1.msra.mxu0 0.0
    %919 = vmatprep.subr.mxu0 0.0
    %920 = vmatpush1.msra.mxu0 0.0
    %921 = vmatprep.subr.mxu0 0.0
    %922 = vmatpush1.msra.mxu0 0.0
    %923 = vmatprep.subr.mxu0 0.0
    %924 = vmatpush1.msra.mxu0 0.0
    %925 = vmatprep.subr.mxu0 0.0
    %926 = vmatpush1.msra.mxu0 0.0
    %927 = vmatprep.subr.mxu0 0.0
    %928 = vmatpush1.msra.mxu0 0.0
    %929 = vmatprep.subr.mxu0 0.0
    %930 = vmatpush1.msra.mxu0 0.0
    %931 = vmatprep.subr.mxu0 0.0
    %932 = vmatpush1.msra.mxu0 0.0
    %933 = vmatprep.subr.mxu0 0.0
    %934 = vmatpush1.msra.mxu0 0.0
    %935 = vmatprep.subr.mxu0 0.0
    %936 = vmatpush1.msra.mxu0 0.0
    %937 = vmatprep.subr.mxu0 0.0
    %938 = vmatpush1.msra.mxu0 0.0
    %939 = vmatprep.subr.mxu0 0.0
    %940 = vmatpush1.msra.mxu0 0.0
    %941 = vmatprep.subr.mxu0 0.0
    %942 = vmatpush1.msra.mxu0 0.0
    %943 = vmatprep.subr.mxu0 0.0
    %944 = vmatpush1.msra.mxu0 0.0
    %945 = vmatprep.subr.mxu0 0.0
    %946 = vmatpush1.msra.mxu0 0.0
    %947 = vmatprep.subr.mxu0 0.0
    %948 = vmatpush1.msra.mxu0 0.0
    %949 = vmatprep.subr.mxu0 0.0
    %950 = vmatpush1.msra.mxu0 0.0
    %951 = vmatprep.subr.mxu0 0.0
    %952 = vmatpush1.msra.mxu0 0.0
    %953 = vmatprep.subr.mxu0 0.0
    %954 = vmatpush1.msra.mxu0 0.0
    %955 = vmatprep.subr.mxu0 0.0
    %956 = vmatpush1.msra.mxu0 0.0
    %957 = vmatprep.subr.mxu0 0.0
    %958 = vmatpush1.msra.mxu0 0.0
    %959 = vmatprep.subr.mxu0 0.0
    %960 = vmatpush1.msra.mxu0 0.0
    %961 = vmatprep.subr.mxu0 0.0
    %962 = vmatpush1.msra.mxu0 0.0
    %963 = vmatprep.subr.mxu0 0.0
    %964 = vmatpush1.msra.mxu0 0.0
    %965 = vmatprep.subr.mxu0 0.0
    %966 = vmatpush1.msra.mxu0 0.0
    %967 = vmatprep.subr.mxu0 0.0
    %968 = vmatpush1.msra.mxu0 0.0
    %969 = vmatprep.subr.mxu0 0.0
    %970 = vmatpush1.msra.mxu0 0.0
    %971 = vmatprep.subr.mxu0 0.0
    %972 = vmatpush1.msra.mxu0 0.0
    %973 = vmatprep.mubr.f32.mxu0 0.0
    %974 = vmatmul.mubr.f32.gmra.mrb[0].mxu0 %v904
    %v975 = vpop.f32.mrb[0].mxu0
    %v976 = vadd.f32 %v901, %v975
    %v977 = vpop.f32.mrb[0].mxu0
    %978 = vmatprep.mubr.f32.mxu0 0.0
    %979 = vmatmul.mubr.f32.gmra.mrb[0].mxu0 %v907
    %v980 = vpop.f32.mrb[0].mxu0
    %v981 = vadd.f32 %v901, %v980
    %v982 = vpop.f32.mrb[0].mxu0
    %983 = vdwg.mxu0
    %v984 = vmax.f32 %v976, 0.0
    %v985 = vmax.f32 %v981, 0.0
    %v986 = vld [vmem:[%s11] sm:$0xff]
    %v987 = vld [vmem:[%s11 + $0x8] sm:$0xff]
    %v988 = vld [vmem:[%s11 + $0x10] sm:$0xff]
    %v989 = vld [vmem:[%s11 + $0x18] sm:$0xff]
    %v990 = vld [vmem:[%s11 + $0x20] sm:$0xff]
    %v991 = vld [vmem:[%s11 + $0x28] sm:$0xff]
    %v992 = vld [vmem:[%s11 + $0x30] sm:$0xff]
    %v993 = vld [vmem:[%s11 + $0x38] sm:$0xff]
    %v994 = vld [vmem:[%s12] sm:$0x1]
    %v996 = vlaneseq
    %v997 = vshrl.u32 %v996, 7
    %v998 = vsub.s32 0, %v997
    %v999 = vrot.slane %v994, %v998
    %v1002 = vsel %vm483, %v984, 0
    %v1005 = vsel %vm483, %v985, 0
    %1007 = vmatprep.subr.mxu0 0.0
    %1008 = vmatpush1.msra.mxu0 %v986
    %1009 = vmatprep.subr.mxu0 0.0
    %1010 = vmatpush1.msra.mxu0 %v987
    %1011 = vmatprep.subr.mxu0 0.0
    %1012 = vmatpush1.msra.mxu0 %v988
    %1013 = vmatprep.subr.mxu0 0.0
    %1014 = vmatpush1.msra.mxu0 %v989
    %1015 = vmatprep.subr.mxu0 0.0
    %1016 = vmatpush1.msra.mxu0 %v990
    %1017 = vmatprep.subr.mxu0 0.0
    %1018 = vmatpush1.msra.mxu0 %v991
    %1019 = vmatprep.subr.mxu0 0.0
    %1020 = vmatpush1.msra.mxu0 %v992
    %1021 = vmatprep.subr.mxu0 0.0
    %1022 = vmatpush1.msra.mxu0 %v993
    %1023 = vmatprep.subr.mxu0 0.0
    %1024 = vmatpush1.msra.mxu0 0.0
    %1025 = vmatprep.subr.mxu0 0.0
    %1026 = vmatpush1.msra.mxu0 0.0
    %1027 = vmatprep.subr.mxu0 0.0
    %1028 = vmatpush1.msra.mxu0 0.0
    %1029 = vmatprep.subr.mxu0 0.0
    %1030 = vmatpush1.msra.mxu0 0.0
    %1031 = vmatprep.subr.mxu0 0.0
    %1032 = vmatpush1.msra.mxu0 0.0
    %1033 = vmatprep.subr.mxu0 0.0
    %1034 = vmatpush1.msra.mxu0 0.0
    %1035 = vmatprep.subr.mxu0 0.0
    %1036 = vmatpush1.msra.mxu0 0.0
    %1037 = vmatprep.subr.mxu0 0.0
    %1038 = vmatpush1.msra.mxu0 0.0
    %1039 = vmatprep.subr.mxu0 0.0
    %1040 = vmatpush1.msra.mxu0 0.0
    %1041 = vmatprep.subr.mxu0 0.0
    %1042 = vmatpush1.msra.mxu0 0.0
    %1043 = vmatprep.subr.mxu0 0.0
    %1044 = vmatpush1.msra.mxu0 0.0
    %1045 = vmatprep.subr.mxu0 0.0
    %1046 = vmatpush1.msra.mxu0 0.0
    %1047 = vmatprep.subr.mxu0 0.0
    %1048 = vmatpush1.msra.mxu0 0.0
    %1049 = vmatprep.subr.mxu0 0.0
    %1050 = vmatpush1.msra.mxu0 0.0
    %1051 = vmatprep.subr.mxu0 0.0
    %1052 = vmatpush1.msra.mxu0 0.0
    %1053 = vmatprep.subr.mxu0 0.0
    %1054 = vmatpush1.msra.mxu0 0.0
    %1055 = vmatprep.subr.mxu0 0.0
    %1056 = vmatpush1.msra.mxu0 0.0
    %1057 = vmatprep.subr.mxu0 0.0
    %1058 = vmatpush1.msra.mxu0 0.0
    %1059 = vmatprep.subr.mxu0 0.0
    %1060 = vmatpush1.msra.mxu0 0.0
    %1061 = vmatprep.subr.mxu0 0.0
    %1062 = vmatpush1.msra.mxu0 0.0
    %1063 = vmatprep.subr.mxu0 0.0
    %1064 = vmatpush1.msra.mxu0 0.0
    %1065 = vmatprep.subr.mxu0 0.0
    %1066 = vmatpush1.msra.mxu0 0.0
    %1067 = vmatprep.subr.mxu0 0.0
    %1068 = vmatpush1.msra.mxu0 0.0
    %1069 = vmatprep.subr.mxu0 0.0
    %1070 = vmatpush1.msra.mxu0 0.0
    %1071 = vmatprep.mubr.f32.mxu0 0.0
    %1072 = vmatmul.mubr.f32.gmra.mrb[0].mxu0 %v1002
    %v1073 = vpop.f32.mrb[0].mxu0
    %v1074 = vadd.f32 %v999, %v1073
    %v1075 = vpop.f32.mrb[0].mxu0
    %1076 = vmatprep.mubr.f32.mxu0 0.0
    %1077 = vmatmul.mubr.f32.gmra.mrb[0].mxu0 %v1005
    %v1078 = vpop.f32.mrb[0].mxu0
    %v1079 = vadd.f32 %v999, %v1078
    %v1080 = vpop.f32.mrb[0].mxu0
    %1081 = vdwg.mxu0
    %v1082 = vadd.f32 %v890, %v1074
    %v1083 = vadd.f32 %v891, %v1079
    %v1084 = vld [vmem:[%s13] sm:$0x1]
    %v1085 = vld [vmem:[%s13 + $0x1] sm:$0x1]
    %v1086 = vsel %vm211, %v1082, 0.0
    %1087 = vadd.xlane.f32.xlu0 %v1086
    %v1088 = vpop.xlane.xlu0 %1087
    %v1089 = vsel %vm211, %v1083, 0.0
    %1090 = vadd.xlane.f32.xlu0 %v1089
    %v1091 = vpop.xlane.xlu0 %1090
    %v1092 = vmul.f32 %v1088, %v859
    %v1093 = vmul.f32 %v1091, %v859
    %v1094 = vsub.f32 %v1082, %v1092
    %v1095 = vsub.f32 %v1083, %v1093
    %v1096 = vmul.f32 %v1094, %v1094
    %v1097 = vmul.f32 %v1095, %v1095
    %v1098 = vsel %vm211, %v1096, 0.0
    %1099 = vadd.xlane.f32.xlu0 %v1098
    %v1100 = vpop.xlane.xlu0 %1099
    %v1101 = vsel %vm211, %v1097, 0.0
    %1102 = vadd.xlane.f32.xlu0 %v1101
    %v1103 = vpop.xlane.xlu0 %1102
    %v1104 = vmul.f32 %v1100, %v859
    %v1105 = vmul.f32 %v1103, %v859
    %v1106 = vadd.f32 %v1104, 1e-05
    %v1107 = vadd.f32 %v1105, 1e-05
    %v1108 = vrsqrt.pop %v1106
    %v1109 = vrsqrt.pop %v1107
    %v1110 = vmul.f32 %v1094, %v1108
    %v1111 = vmul.f32 %v1095, %v1109
    %v1112 = vlaneseq
    %v1113 = vshrl.u32 %v1112, 7
    %v1114 = vsub.s32 0, %v1113
    %v1115 = vrot.slane %v1084, %v1114
    %v1116 = vmul.f32 %v1110, %v1115
    %v1117 = vmul.f32 %v1111, %v1115
    %v1118 = vlaneseq
    %v1119 = vshrl.u32 %v1118, 7
    %v1120 = vsub.s32 0, %v1119
    %v1121 = vrot.slane %v1085, %v1120
    %v1122 = vadd.f32 %v1116, %v1121
    %v1123 = vadd.f32 %v1117, %v1121
    %v1124 = vld [vmem:[%s14] sm:$0xff]
    %v1125 = vld [vmem:[%s14 + $0x8] sm:$0xff]
    %v1126 = vld [vmem:[%s14 + $0x10] sm:$0xff]
    %v1127 = vld [vmem:[%s14 + $0x18] sm:$0xff]
    %v1128 = vld [vmem:[%s15] sm:$0x1]
    %v1130 = vlaneseq
    %v1131 = vshrl.u32 %v1130, 7
    %v1132 = vsub.s32 0, %v1131
    %v1133 = vrot.slane %v1128, %v1132
    %v1136 = vsel %vm211, %v1122, 0
    %v1139 = vsel %vm211, %v1123, 0
    %1141 = vmatprep.subr.mxu0 0.0
    %1142 = vmatpush1.msra.mxu0 %v1124
    %1143 = vmatprep.subr.mxu0 0.0
    %1144 = vmatpush1.msra.mxu0 %v1125
    %1145 = vmatprep.subr.mxu0 0.0
    %1146 = vmatpush1.msra.mxu0 %v1126
    %1147 = vmatprep.subr.mxu0 0.0
    %1148 = vmatpush1.msra.mxu0 %v1127
    %1149 = vmatprep.subr.mxu0 0.0
    %1150 = vmatpush1.msra.mxu0 0.0
    %1151 = vmatprep.subr.mxu0 0.0
    %1152 = vmatpush1.msra.mxu0 0.0
    %1153 = vmatprep.subr.mxu0 0.0
    %1154 = vmatpush1.msra.mxu0 0.0
    %1155 = vmatprep.subr.mxu0 0.0
    %1156 = vmatpush1.msra.mxu0 0.0
    %1157 = vmatprep.subr.mxu0 0.0
    %1158 = vmatpush1.msra.mxu0 0.0
    %1159 = vmatprep.subr.mxu0 0.0
    %1160 = vmatpush1.msra.mxu0 0.0
    %1161 = vmatprep.subr.mxu0 0.0
    %1162 = vmatpush1.msra.mxu0 0.0
    %1163 = vmatprep.subr.mxu0 0.0
    %1164 = vmatpush1.msra.mxu0 0.0
    %1165 = vmatprep.subr.mxu0 0.0
    %1166 = vmatpush1.msra.mxu0 0.0
    %1167 = vmatprep.subr.mxu0 0.0
    %1168 = vmatpush1.msra.mxu0 0.0
    %1169 = vmatprep.subr.mxu0 0.0
    %1170 = vmatpush1.msra.mxu0 0.0
    %1171 = vmatprep.subr.mxu0 0.0
    %1172 = vmatpush1.msra.mxu0 0.0
    %1173 = vmatprep.subr.mxu0 0.0
    %1174 = vmatpush1.msra.mxu0 0.0
    %1175 = vmatprep.subr.mxu0 0.0
    %1176 = vmatpush1.msra.mxu0 0.0
    %1177 = vmatprep.subr.mxu0 0.0
    %1178 = vmatpush1.msra.mxu0 0.0
    %1179 = vmatprep.subr.mxu0 0.0
    %1180 = vmatpush1.msra.mxu0 0.0
    %1181 = vmatprep.subr.mxu0 0.0
    %1182 = vmatpush1.msra.mxu0 0.0
    %1183 = vmatprep.subr.mxu0 0.0
    %1184 = vmatpush1.msra.mxu0 0.0
    %1185 = vmatprep.subr.mxu0 0.0
    %1186 = vmatpush1.msra.mxu0 0.0
    %1187 = vmatprep.subr.mxu0 0.0
    %1188 = vmatpush1.msra.mxu0 0.0
    %1189 = vmatprep.subr.mxu0 0.0
    %1190 = vmatpush1.msra.mxu0 0.0
    %1191 = vmatprep.subr.mxu0 0.0
    %1192 = vmatpush1.msra.mxu0 0.0
    %1193 = vmatprep.subr.mxu0 0.0
    %1194 = vmatpush1.msra.mxu0 0.0
    %1195 = vmatprep.subr.mxu0 0.0
    %1196 = vmatpush1.msra.mxu0 0.0
    %1197 = vmatprep.subr.mxu0 0.0
    %1198 = vmatpush1.msra.mxu0 0.0
    %1199 = vmatprep.subr.mxu0 0.0
    %1200 = vmatpush1.msra.mxu0 0.0
    %1201 = vmatprep.subr.mxu0 0.0
    %1202 = vmatpush1.msra.mxu0 0.0
    %1203 = vmatprep.subr.mxu0 0.0
    %1204 = vmatpush1.msra.mxu0 0.0
    %1205 = vmatprep.mubr.f32.mxu0 0.0
    %1206 = vmatmul.mubr.f32.gmra.mrb[0].mxu0 %v1136
    %v1207 = vpop.f32.mrb[0].mxu0
    %v1208 = vadd.f32 %v1133, %v1207
    %v1209 = vpop.f32.mrb[0].mxu0
    %1210 = vmatprep.mubr.f32.mxu0 0.0
    %1211 = vmatmul.mubr.f32.gmra.mrb[0].mxu0 %v1139
    %v1212 = vpop.f32.mrb[0].mxu0
    %v1213 = vadd.f32 %v1133, %v1212
    %v1214 = vpop.f32.mrb[0].mxu0
    %1215 = vdwg.mxu0
    %1218 = vrot.lane.b32.xlu0 %v1208, 120
    %v1219 = vpop.permute.xlu0 %1218
    %1220 = vrot.lane.b32.xlu0 %v1213, 120
    %v1221 = vpop.permute.xlu0 %1220
    %1224 = vrot.lane.b32.xlu0 %v1208, 112
    %v1225 = vpop.permute.xlu0 %1224
    %1226 = vrot.lane.b32.xlu0 %v1213, 112
    %v1227 = vpop.permute.xlu0 %1226
    %1230 = vrot.lane.b32.xlu0 %v1208, 104
    %v1231 = vpop.permute.xlu0 %1230
    %1232 = vrot.lane.b32.xlu0 %v1213, 104
    %v1233 = vpop.permute.xlu0 %1232
    %v1236 = vmul.f32 %v1208, 0.35355338
    %v1237 = vmul.f32 %v1213, 0.35355338
    %v1238 = vmul.f32 %v1219, 0.35355338
    %v1239 = vmul.f32 %v1221, 0.35355338
    %v1240 = vmul.f32 %v1225, 0.35355338
    %v1241 = vmul.f32 %v1227, 0.35355338
    %v1242 = vmul.f32 %v1231, 0.35355338
    %v1243 = vmul.f32 %v1233, 0.35355338
    %1244 = vrot.lane.b32.xlu0 %v1208, 96
    %v1245 = vpop.permute.xlu0 %1244
    %1246 = vrot.lane.b32.xlu0 %v1213, 96
    %v1247 = vpop.permute.xlu0 %1246
    %1248 = vrot.lane.b32.xlu0 %v1219, 96
    %v1249 = vpop.permute.xlu0 %1248
    %1250 = vrot.lane.b32.xlu0 %v1221, 96
    %v1251 = vpop.permute.xlu0 %1250
    %1252 = vrot.lane.b32.xlu0 %v1225, 96
    %v1253 = vpop.permute.xlu0 %1252
    %1254 = vrot.lane.b32.xlu0 %v1227, 96
    %v1255 = vpop.permute.xlu0 %1254
    %1256 = vrot.lane.b32.xlu0 %v1231, 96
    %v1257 = vpop.permute.xlu0 %1256
    %1258 = vrot.lane.b32.xlu0 %v1233, 96
    %v1259 = vpop.permute.xlu0 %1258
    %v1261 = vsel %vm337, %v1236, 0
    %v1264 = vsel %vm337, %v1237, 0
    %v1267 = vsel %vm337, %v1238, 0
    %v1270 = vsel %vm337, %v1239, 0
    %v1273 = vsel %vm337, %v1240, 0
    %v1276 = vsel %vm337, %v1241, 0
    %v1279 = vsel %vm337, %v1242, 0
    %v1282 = vsel %vm337, %v1243, 0
    %v1284 = vsel %vm337, %v1245, 0
    %v1286 = vsel %vm337, %v1247, 0
    %v1288 = vsel %vm337, %v1249, 0
    %v1290 = vsel %vm337, %v1251, 0
    %v1292 = vsel %vm337, %v1253, 0
    %v1294 = vsel %vm337, %v1255, 0
    %v1296 = vsel %vm337, %v1257, 0
    %v1298 = vsel %vm337, %v1259, 0
    %1300 = vmatprep.subr.mxu0 0.0
    %1301 = vmatpush1.xpose.msra.mxu0 %v1284
    %1302 = vmatprep.subr.mxu0 0.0
    %1303 = vmatpush1.xpose.msra.mxu0 %v1286
    %1304 = vmatprep.subr.mxu0 0.0
    %1305 = vmatpush1.xpose.msra.mxu0 %v1288
    %1306 = vmatprep.subr.mxu0 0.0
    %1307 = vmatpush1.xpose.msra.mxu0 %v1290
    %1308 = vmatprep.subr.mxu0 0.0
    %1309 = vmatpush1.xpose.msra.mxu0 %v1292
    %1310 = vmatprep.subr.mxu0 0.0
    %1311 = vmatpush1.xpose.msra.mxu0 %v1294
    %1312 = vmatprep.subr.mxu0 0.0
    %1313 = vmatpush1.xpose.msra.mxu0 %v1296
    %1314 = vmatprep.subr.mxu0 0.0
    %1315 = vmatpush1.xpose.msra.mxu0 %v1298
    %1316 = vmatprep.subr.mxu0 0.0
    %1317 = vmatpush1.xpose.msra.mxu0 0.0
    %1318 = vmatprep.subr.mxu0 0.0
    %1319 = vmatpush1.xpose.msra.mxu0 0.0
    %1320 = vmatprep.subr.mxu0 0.0
    %1321 = vmatpush1.xpose.msra.mxu0 0.0
    %1322 = vmatprep.subr.mxu0 0.0
    %1323 = vmatpush1.xpose.msra.mxu0 0.0
    %1324 = vmatprep.subr.mxu0 0.0
    %1325 = vmatpush1.xpose.msra.mxu0 0.0
    %1326 = vmatprep.subr.mxu0 0.0
    %1327 = vmatpush1.xpose.msra.mxu0 0.0
    %1328 = vmatprep.subr.mxu0 0.0
    %1329 = vmatpush1.xpose.msra.mxu0 0.0
    %1330 = vmatprep.subr.mxu0 0.0
    %1331 = vmatpush1.xpose.msra.mxu0 0.0
    %1332 = vmatprep.subr.mxu0 0.0
    %1333 = vmatpush1.xpose.msra.mxu0 0.0
    %1334 = vmatprep.subr.mxu0 0.0
    %1335 = vmatpush1.xpose.msra.mxu0 0.0
    %1336 = vmatprep.subr.mxu0 0.0
    %1337 = vmatpush1.xpose.msra.mxu0 0.0
    %1338 = vmatprep.subr.mxu0 0.0
    %1339 = vmatpush1.xpose.msra.mxu0 0.0
    %1340 = vmatprep.subr.mxu0 0.0
    %1341 = vmatpush1.xpose.msra.mxu0 0.0
    %1342 = vmatprep.subr.mxu0 0.0
    %1343 = vmatpush1.xpose.msra.mxu0 0.0
    %1344 = vmatprep.subr.mxu0 0.0
    %1345 = vmatpush1.xpose.msra.mxu0 0.0
    %1346 = vmatprep.subr.mxu0 0.0
    %1347 = vmatpush1.xpose.msra.mxu0 0.0
    %1348 = vmatprep.subr.mxu0 0.0
    %1349 = vmatpush1.xpose.msra.mxu0 0.0
    %1350 = vmatprep.subr.mxu0 0.0
    %1351 = vmatpush1.xpose.msra.mxu0 0.0
    %1352 = vmatprep.subr.mxu0 0.0
    %1353 = vmatpush1.xpose.msra.mxu0 0.0
    %1354 = vmatprep.subr.mxu0 0.0
    %1355 = vmatpush1.xpose.msra.mxu0 0.0
    %1356 = vmatprep.subr.mxu0 0.0
    %1357 = vmatpush1.xpose.msra.mxu0 0.0
    %1358 = vmatprep.subr.mxu0 0.0
    %1359 = vmatpush1.xpose.msra.mxu0 0.0
    %1360 = vmatprep.subr.mxu0 0.0
    %1361 = vmatpush1.xpose.msra.mxu0 0.0
    %1362 = vmatprep.subr.mxu0 0.0
    %1363 = vmatpush1.xpose.msra.mxu0 0.0
    %1364 = vmatprep.mubr.f32.mxu0 0.0
    %1365 = vmatmul.mubr.f32.gmra.mrb[0].mxu0 %v1261
    %v1366 = vpop.f32.mrb[0].mxu0
    %v1367 = vadd.f32 %v192, %v1366
    %v1368 = vpop.f32.mrb[0].mxu0
    %1369 = vmatprep.mubr.f32.mxu0 0.0
    %1370 = vmatmul.mubr.f32.gmra.mrb[0].mxu0 %v1264
    %v1371 = vpop.f32.mrb[0].mxu0
    %v1372 = vadd.f32 %v193, %v1371
    %v1373 = vpop.f32.mrb[0].mxu0
    %1374 = vmatprep.mubr.f32.mxu0 0.0
    %1375 = vmatmul.mubr.f32.gmra.mrb[0].mxu0 %v1267
    %v1376 = vpop.f32.mrb[0].mxu0
    %v1377 = vadd.f32 %v194, %v1376
    %v1378 = vpop.f32.mrb[0].mxu0
    %1379 = vmatprep.mubr.f32.mxu0 0.0
    %1380 = vmatmul.mubr.f32.gmra.mrb[0].mxu0 %v1270
    %v1381 = vpop.f32.mrb[0].mxu0
    %v1382 = vadd.f32 %v195, %v1381
    %v1383 = vpop.f32.mrb[0].mxu0
    %1384 = vmatprep.mubr.f32.mxu0 0.0
    %1385 = vmatmul.mubr.f32.gmra.mrb[0].mxu0 %v1273
    %v1386 = vpop.f32.mrb[0].mxu0
    %v1387 = vadd.f32 %v196, %v1386
    %v1388 = vpop.f32.mrb[0].mxu0
    %1389 = vmatprep.mubr.f32.mxu0 0.0
    %1390 = vmatmul.mubr.f32.gmra.mrb[0].mxu0 %v1276
    %v1391 = vpop.f32.mrb[0].mxu0
    %v1392 = vadd.f32 %v197, %v1391
    %v1393 = vpop.f32.mrb[0].mxu0
    %1394 = vmatprep.mubr.f32.mxu0 0.0
    %1395 = vmatmul.mubr.f32.gmra.mrb[0].mxu0 %v1279
    %v1396 = vpop.f32.mrb[0].mxu0
    %v1397 = vadd.f32 %v198, %v1396
    %v1398 = vpop.f32.mrb[0].mxu0
    %1399 = vmatprep.mubr.f32.mxu0 0.0
    %1400 = vmatmul.mubr.f32.gmra.mrb[0].mxu0 %v1282
    %v1401 = vpop.f32.mrb[0].mxu0
    %v1402 = vadd.f32 %v199, %v1401
    %v1403 = vpop.f32.mrb[0].mxu0
    %1404 = vdwg.mxu0
    %v1405 = vsel %vm483, %v1367, -inf
    %1406 = vmax.xlane.f32.xlu0 %v1405
    %v1407 = vpop.xlane.xlu0 %1406
    %v1408 = vsel %vm483, %v1372, -inf
    %1409 = vmax.xlane.f32.xlu0 %v1408
    %v1410 = vpop.xlane.xlu0 %1409
    %v1411 = vsel %vm483, %v1377, -inf
    %1412 = vmax.xlane.f32.xlu0 %v1411
    %v1413 = vpop.xlane.xlu0 %1412
    %v1414 = vsel %vm483, %v1382, -inf
    %1415 = vmax.xlane.f32.xlu0 %v1414
    %v1416 = vpop.xlane.xlu0 %1415
    %v1417 = vsel %vm483, %v1387, -inf
    %1418 = vmax.xlane.f32.xlu0 %v1417
    %v1419 = vpop.xlane.xlu0 %1418
    %v1420 = vsel %vm483, %v1392, -inf
    %1421 = vmax.xlane.f32.xlu0 %v1420
    %v1422 = vpop.xlane.xlu0 %1421
    %v1423 = vsel %vm483, %v1397, -inf
    %1424 = vmax.xlane.f32.xlu0 %v1423
    %v1425 = vpop.xlane.xlu0 %1424
    %v1426 = vsel %vm483, %v1402, -inf
    %1427 = vmax.xlane.f32.xlu0 %v1426
    %v1428 = vpop.xlane.xlu0 %1427
    %v1429 = vsub.f32 %v1367, %v1407
    %v1430 = vsub.f32 %v1372, %v1410
    %v1431 = vsub.f32 %v1377, %v1413
    %v1432 = vsub.f32 %v1382, %v1416
    %v1433 = vsub.f32 %v1387, %v1419
    %v1434 = vsub.f32 %v1392, %v1422
    %v1435 = vsub.f32 %v1397, %v1425
    %v1436 = vsub.f32 %v1402, %v1428
    %v1437 = vmul.f32 %v1429, 1.442695
    %v1438 = vpow.pop %v1437
    %v1439 = vmul.f32 %v1430, 1.442695
    %v1440 = vpow.pop %v1439
    %v1441 = vmul.f32 %v1431, 1.442695
    %v1442 = vpow.pop %v1441
    %v1443 = vmul.f32 %v1432, 1.442695
    %v1444 = vpow.pop %v1443
    %v1445 = vmul.f32 %v1433, 1.442695
    %v1446 = vpow.pop %v1445
    %v1447 = vmul.f32 %v1434, 1.442695
    %v1448 = vpow.pop %v1447
    %v1449 = vmul.f32 %v1435, 1.442695
    %v1450 = vpow.pop %v1449
    %v1451 = vmul.f32 %v1436, 1.442695
    %v1452 = vpow.pop %v1451
    %v1453 = vsel %vm483, %v1438, 0.0
    %1454 = vadd.xlane.f32.xlu0 %v1453
    %v1455 = vpop.xlane.xlu0 %1454
    %v1456 = vsel %vm483, %v1440, 0.0
    %1457 = vadd.xlane.f32.xlu0 %v1456
    %v1458 = vpop.xlane.xlu0 %1457
    %v1459 = vsel %vm483, %v1442, 0.0
    %1460 = vadd.xlane.f32.xlu0 %v1459
    %v1461 = vpop.xlane.xlu0 %1460
    %v1462 = vsel %vm483, %v1444, 0.0
    %1463 = vadd.xlane.f32.xlu0 %v1462
    %v1464 = vpop.xlane.xlu0 %1463
    %v1465 = vsel %vm483, %v1446, 0.0
    %1466 = vadd.xlane.f32.xlu0 %v1465
    %v1467 = vpop.xlane.xlu0 %1466
    %v1468 = vsel %vm483, %v1448, 0.0
    %1469 = vadd.xlane.f32.xlu0 %v1468
    %v1470 = vpop.xlane.xlu0 %1469
    %v1471 = vsel %vm483, %v1450, 0.0
    %1472 = vadd.xlane.f32.xlu0 %v1471
    %v1473 = vpop.xlane.xlu0 %1472
    %v1474 = vsel %vm483, %v1452, 0.0
    %1475 = vadd.xlane.f32.xlu0 %v1474
    %v1476 = vpop.xlane.xlu0 %1475
    %v1477 = vrcp.pop %v1455
    %v1478 = vmul.f32 %v1438, %v1477
    %v1479 = vrcp.pop %v1458
    %v1480 = vmul.f32 %v1440, %v1479
    %v1481 = vrcp.pop %v1461
    %v1482 = vmul.f32 %v1442, %v1481
    %v1483 = vrcp.pop %v1464
    %v1484 = vmul.f32 %v1444, %v1483
    %v1485 = vrcp.pop %v1467
    %v1486 = vmul.f32 %v1446, %v1485
    %v1487 = vrcp.pop %v1470
    %v1488 = vmul.f32 %v1448, %v1487
    %v1489 = vrcp.pop %v1473
    %v1490 = vmul.f32 %v1450, %v1489
    %v1491 = vrcp.pop %v1476
    %v1492 = vmul.f32 %v1452, %v1491
    %1493 = vrot.lane.b32.xlu0 %v1208, 64
    %v1494 = vpop.permute.xlu0 %1493
    %1495 = vrot.lane.b32.xlu0 %v1213, 64
    %v1496 = vpop.permute.xlu0 %1495
    %1497 = vrot.lane.b32.xlu0 %v1219, 64
    %v1498 = vpop.permute.xlu0 %1497
    %1499 = vrot.lane.b32.xlu0 %v1221, 64
    %v1500 = vpop.permute.xlu0 %1499
    %1501 = vrot.lane.b32.xlu0 %v1225, 64
    %v1502 = vpop.permute.xlu0 %1501
    %1503 = vrot.lane.b32.xlu0 %v1227, 64
    %v1504 = vpop.permute.xlu0 %1503
    %1505 = vrot.lane.b32.xlu0 %v1231, 64
    %v1506 = vpop.permute.xlu0 %1505
    %1507 = vrot.lane.b32.xlu0 %v1233, 64
    %v1508 = vpop.permute.xlu0 %1507
    %v1518 = vsel %vm483, %v1478, 0
    %v1521 = vsel %vm483, %v1480, 0
    %v1524 = vsel %vm483, %v1482, 0
    %v1527 = vsel %vm483, %v1484, 0
    %v1530 = vsel %vm483, %v1486, 0
    %v1533 = vsel %vm483, %v1488, 0
    %v1536 = vsel %vm483, %v1490, 0
    %v1539 = vsel %vm483, %v1492, 0
    %1541 = vmatprep.subr.mxu0 0.0
    %1542 = vmatpush1.msra.mxu0 %v1494
    %1543 = vmatprep.subr.mxu0 0.0
    %1544 = vmatpush1.msra.mxu0 %v1496
    %1545 = vmatprep.subr.mxu0 0.0
    %1546 = vmatpush1.msra.mxu0 %v1498
    %1547 = vmatprep.subr.mxu0 0.0
    %1548 = vmatpush1.msra.mxu0 %v1500
    %1549 = vmatprep.subr.mxu0 0.0
    %1550 = vmatpush1.msra.mxu0 %v1502
    %1551 = vmatprep.subr.mxu0 0.0
    %1552 = vmatpush1.msra.mxu0 %v1504
    %1553 = vmatprep.subr.mxu0 0.0
    %1554 = vmatpush1.msra.mxu0 %v1506
    %1555 = vmatprep.subr.mxu0 0.0
    %1556 = vmatpush1.msra.mxu0 %v1508
    %1557 = vmatprep.subr.mxu0 0.0
    %1558 = vmatpush1.msra.mxu0 0.0
    %1559 = vmatprep.subr.mxu0 0.0
    %1560 = vmatpush1.msra.mxu0 0.0
    %1561 = vmatprep.subr.mxu0 0.0
    %1562 = vmatpush1.msra.mxu0 0.0
    %1563 = vmatprep.subr.mxu0 0.0
    %1564 = vmatpush1.msra.mxu0 0.0
    %1565 = vmatprep.subr.mxu0 0.0
    %1566 = vmatpush1.msra.mxu0 0.0
    %1567 = vmatprep.subr.mxu0 0.0
    %1568 = vmatpush1.msra.mxu0 0.0
    %1569 = vmatprep.subr.mxu0 0.0
    %1570 = vmatpush1.msra.mxu0 0.0
    %1571 = vmatprep.subr.mxu0 0.0
    %1572 = vmatpush1.msra.mxu0 0.0
    %1573 = vmatprep.subr.mxu0 0.0
    %1574 = vmatpush1.msra.mxu0 0.0
    %1575 = vmatprep.subr.mxu0 0.0
    %1576 = vmatpush1.msra.mxu0 0.0
    %1577 = vmatprep.subr.mxu0 0.0
    %1578 = vmatpush1.msra.mxu0 0.0
    %1579 = vmatprep.subr.mxu0 0.0
    %1580 = vmatpush1.msra.mxu0 0.0
    %1581 = vmatprep.subr.mxu0 0.0
    %1582 = vmatpush1.msra.mxu0 0.0
    %1583 = vmatprep.subr.mxu0 0.0
    %1584 = vmatpush1.msra.mxu0 0.0
    %1585 = vmatprep.subr.mxu0 0.0
    %1586 = vmatpush1.msra.mxu0 0.0
    %1587 = vmatprep.subr.mxu0 0.0
    %1588 = vmatpush1.msra.mxu0 0.0
    %1589 = vmatprep.subr.mxu0 0.0
    %1590 = vmatpush1.msra.mxu0 0.0
    %1591 = vmatprep.subr.mxu0 0.0
    %1592 = vmatpush1.msra.mxu0 0.0
    %1593 = vmatprep.subr.mxu0 0.0
    %1594 = vmatpush1.msra.mxu0 0.0
    %1595 = vmatprep.subr.mxu0 0.0
    %1596 = vmatpush1.msra.mxu0 0.0
    %1597 = vmatprep.subr.mxu0 0.0
    %1598 = vmatpush1.msra.mxu0 0.0
    %1599 = vmatprep.subr.mxu0 0.0
    %1600 = vmatpush1.msra.mxu0 0.0
    %1601 = vmatprep.subr.mxu0 0.0
    %1602 = vmatpush1.msra.mxu0 0.0
    %1603 = vmatprep.subr.mxu0 0.0
    %1604 = vmatpush1.msra.mxu0 0.0
    %1605 = vmatprep.mubr.f32.mxu0 0.0
    %1606 = vmatmul.mubr.f32.gmra.mrb[0].mxu0 %v1518
    %v1607 = vpop.f32.mrb[0].mxu0
    %v1608 = vadd.f32 0.0, %v1607
    %v1609 = vpop.f32.mrb[0].mxu0
    %1610 = vmatprep.mubr.f32.mxu0 0.0
    %1611 = vmatmul.mubr.f32.gmra.mrb[0].mxu0 %v1521
    %v1612 = vpop.f32.mrb[0].mxu0
    %v1613 = vadd.f32 0.0, %v1612
    %v1614 = vpop.f32.mrb[0].mxu0
    %1615 = vmatprep.mubr.f32.mxu0 0.0
    %1616 = vmatmul.mubr.f32.gmra.mrb[0].mxu0 %v1524
    %v1617 = vpop.f32.mrb[0].mxu0
    %v1618 = vadd.f32 0.0, %v1617
    %v1619 = vpop.f32.mrb[0].mxu0
    %1620 = vmatprep.mubr.f32.mxu0 0.0
    %1621 = vmatmul.mubr.f32.gmra.mrb[0].mxu0 %v1527
    %v1622 = vpop.f32.mrb[0].mxu0
    %v1623 = vadd.f32 0.0, %v1622
    %v1624 = vpop.f32.mrb[0].mxu0
    %1625 = vmatprep.mubr.f32.mxu0 0.0
    %1626 = vmatmul.mubr.f32.gmra.mrb[0].mxu0 %v1530
    %v1627 = vpop.f32.mrb[0].mxu0
    %v1628 = vadd.f32 0.0, %v1627
    %v1629 = vpop.f32.mrb[0].mxu0
    %1630 = vmatprep.mubr.f32.mxu0 0.0
    %1631 = vmatmul.mubr.f32.gmra.mrb[0].mxu0 %v1533
    %v1632 = vpop.f32.mrb[0].mxu0
    %v1633 = vadd.f32 0.0, %v1632
    %v1634 = vpop.f32.mrb[0].mxu0
    %1635 = vmatprep.mubr.f32.mxu0 0.0
    %1636 = vmatmul.mubr.f32.gmra.mrb[0].mxu0 %v1536
    %v1637 = vpop.f32.mrb[0].mxu0
    %v1638 = vadd.f32 0.0, %v1637
    %v1639 = vpop.f32.mrb[0].mxu0
    %1640 = vmatprep.mubr.f32.mxu0 0.0
    %1641 = vmatmul.mubr.f32.gmra.mrb[0].mxu0 %v1539
    %v1642 = vpop.f32.mrb[0].mxu0
    %v1643 = vadd.f32 0.0, %v1642
    %v1644 = vpop.f32.mrb[0].mxu0
    %1645 = vdwg.mxu0
    %1648 = vrot.lane.b32.xlu0 %v1618, 8
    %v1649 = vpop.permute.xlu0 %1648
    %1650 = vrot.lane.b32.xlu0 %v1623, 8
    %v1651 = vpop.permute.xlu0 %1650
    %1656 = vrot.lane.b32.xlu0 %v1628, 16
    %v1657 = vpop.permute.xlu0 %1656
    %1658 = vrot.lane.b32.xlu0 %v1633, 16
    %v1659 = vpop.permute.xlu0 %1658
    %1664 = vrot.lane.b32.xlu0 %v1638, 24
    %v1665 = vpop.permute.xlu0 %1664
    %1666 = vrot.lane.b32.xlu0 %v1643, 24
    %v1667 = vpop.permute.xlu0 %1666
    %v1670 = vsel %vm337, %v1608, %v1649
    %v1671 = vsel %vm337, %v1613, %v1651
    %v1672 = vsel %vm751, %v1670, %v1657
    %v1673 = vsel %vm751, %v1671, %v1659
    %v1674 = vsel %vm754, %v1672, %v1665
    %v1675 = vsel %vm754, %v1673, %v1667
    %v1676 = vld [vmem:[%s16] sm:$0xff]
    %v1677 = vld [vmem:[%s16 + $0x8] sm:$0xff]
    %v1678 = vld [vmem:[%s16 + $0x10] sm:$0xff]
    %v1679 = vld [vmem:[%s16 + $0x18] sm:$0xff]
    %v1680 = vld [vmem:[%s17] sm:$0x1]
    %v1682 = vlaneseq
    %v1683 = vshrl.u32 %v1682, 7
    %v1684 = vsub.s32 0, %v1683
    %v1685 = vrot.slane %v1680, %v1684
    %v1688 = vsel %vm211, %v1674, 0
    %v1691 = vsel %vm211, %v1675, 0
    %1693 = vmatprep.subr.mxu0 0.0
    %1694 = vmatpush1.msra.mxu0 %v1676
    %1695 = vmatprep.subr.mxu0 0.0
    %1696 = vmatpush1.msra.mxu0 %v1677
    %1697 = vmatprep.subr.mxu0 0.0
    %1698 = vmatpush1.msra.mxu0 %v1678
    %1699 = vmatprep.subr.mxu0 0.0
    %1700 = vmatpush1.msra.mxu0 %v1679
    %1701 = vmatprep.subr.mxu0 0.0
    %1702 = vmatpush1.msra.mxu0 0.0
    %1703 = vmatprep.subr.mxu0 0.0
    %1704 = vmatpush1.msra.mxu0 0.0
    %1705 = vmatprep.subr.mxu0 0.0
    %1706 = vmatpush1.msra.mxu0 0.0
    %1707 = vmatprep.subr.mxu0 0.0
    %1708 = vmatpush1.msra.mxu0 0.0
    %1709 = vmatprep.subr.mxu0 0.0
    %1710 = vmatpush1.msra.mxu0 0.0
    %1711 = vmatprep.subr.mxu0 0.0
    %1712 = vmatpush1.msra.mxu0 0.0
    %1713 = vmatprep.subr.mxu0 0.0
    %1714 = vmatpush1.msra.mxu0 0.0
    %1715 = vmatprep.subr.mxu0 0.0
    %1716 = vmatpush1.msra.mxu0 0.0
    %1717 = vmatprep.subr.mxu0 0.0
    %1718 = vmatpush1.msra.mxu0 0.0
    %1719 = vmatprep.subr.mxu0 0.0
    %1720 = vmatpush1.msra.mxu0 0.0
    %1721 = vmatprep.subr.mxu0 0.0
    %1722 = vmatpush1.msra.mxu0 0.0
    %1723 = vmatprep.subr.mxu0 0.0
    %1724 = vmatpush1.msra.mxu0 0.0
    %1725 = vmatprep.subr.mxu0 0.0
    %1726 = vmatpush1.msra.mxu0 0.0
    %1727 = vmatprep.subr.mxu0 0.0
    %1728 = vmatpush1.msra.mxu0 0.0
    %1729 = vmatprep.subr.mxu0 0.0
    %1730 = vmatpush1.msra.mxu0 0.0
    %1731 = vmatprep.subr.mxu0 0.0
    %1732 = vmatpush1.msra.mxu0 0.0
    %1733 = vmatprep.subr.mxu0 0.0
    %1734 = vmatpush1.msra.mxu0 0.0
    %1735 = vmatprep.subr.mxu0 0.0
    %1736 = vmatpush1.msra.mxu0 0.0
    %1737 = vmatprep.subr.mxu0 0.0
    %1738 = vmatpush1.msra.mxu0 0.0
    %1739 = vmatprep.subr.mxu0 0.0
    %1740 = vmatpush1.msra.mxu0 0.0
    %1741 = vmatprep.subr.mxu0 0.0
    %1742 = vmatpush1.msra.mxu0 0.0
    %1743 = vmatprep.subr.mxu0 0.0
    %1744 = vmatpush1.msra.mxu0 0.0
    %1745 = vmatprep.subr.mxu0 0.0
    %1746 = vmatpush1.msra.mxu0 0.0
    %1747 = vmatprep.subr.mxu0 0.0
    %1748 = vmatpush1.msra.mxu0 0.0
    %1749 = vmatprep.subr.mxu0 0.0
    %1750 = vmatpush1.msra.mxu0 0.0
    %1751 = vmatprep.subr.mxu0 0.0
    %1752 = vmatpush1.msra.mxu0 0.0
    %1753 = vmatprep.subr.mxu0 0.0
    %1754 = vmatpush1.msra.mxu0 0.0
    %1755 = vmatprep.subr.mxu0 0.0
    %1756 = vmatpush1.msra.mxu0 0.0
    %1757 = vmatprep.mubr.f32.mxu0 0.0
    %1758 = vmatmul.mubr.f32.gmra.mrb[0].mxu0 %v1688
    %v1759 = vpop.f32.mrb[0].mxu0
    %v1760 = vadd.f32 %v1685, %v1759
    %v1761 = vpop.f32.mrb[0].mxu0
    %1762 = vmatprep.mubr.f32.mxu0 0.0
    %1763 = vmatmul.mubr.f32.gmra.mrb[0].mxu0 %v1691
    %v1764 = vpop.f32.mrb[0].mxu0
    %v1765 = vadd.f32 %v1685, %v1764
    %v1766 = vpop.f32.mrb[0].mxu0
    %1767 = vdwg.mxu0
    %v1768 = vadd.f32 %v1122, %v1760
    %v1769 = vadd.f32 %v1123, %v1765
    %v1770 = vld [vmem:[%s18] sm:$0x1]
    %v1771 = vld [vmem:[%s18 + $0x1] sm:$0x1]
    %v1772 = vsel %vm211, %v1768, 0.0
    %1773 = vadd.xlane.f32.xlu0 %v1772
    %v1774 = vpop.xlane.xlu0 %1773
    %v1775 = vsel %vm211, %v1769, 0.0
    %1776 = vadd.xlane.f32.xlu0 %v1775
    %v1777 = vpop.xlane.xlu0 %1776
    %v1778 = vmul.f32 %v1774, %v859
    %v1779 = vmul.f32 %v1777, %v859
    %v1780 = vsub.f32 %v1768, %v1778
    %v1781 = vsub.f32 %v1769, %v1779
    %v1782 = vmul.f32 %v1780, %v1780
    %v1783 = vmul.f32 %v1781, %v1781
    %v1784 = vsel %vm211, %v1782, 0.0
    %1785 = vadd.xlane.f32.xlu0 %v1784
    %v1786 = vpop.xlane.xlu0 %1785
    %v1787 = vsel %vm211, %v1783, 0.0
    %1788 = vadd.xlane.f32.xlu0 %v1787
    %v1789 = vpop.xlane.xlu0 %1788
    %v1790 = vmul.f32 %v1786, %v859
    %v1791 = vmul.f32 %v1789, %v859
    %v1792 = vadd.f32 %v1790, 1e-05
    %v1793 = vadd.f32 %v1791, 1e-05
    %v1794 = vrsqrt.pop %v1792
    %v1795 = vrsqrt.pop %v1793
    %v1796 = vmul.f32 %v1780, %v1794
    %v1797 = vmul.f32 %v1781, %v1795
    %v1798 = vlaneseq
    %v1799 = vshrl.u32 %v1798, 7
    %v1800 = vsub.s32 0, %v1799
    %v1801 = vrot.slane %v1770, %v1800
    %v1802 = vmul.f32 %v1796, %v1801
    %v1803 = vmul.f32 %v1797, %v1801
    %v1804 = vlaneseq
    %v1805 = vshrl.u32 %v1804, 7
    %v1806 = vsub.s32 0, %v1805
    %v1807 = vrot.slane %v1771, %v1806
    %v1808 = vadd.f32 %v1802, %v1807
    %v1809 = vadd.f32 %v1803, %v1807
    %v1810 = vld [vmem:[%s19] sm:$0xff]
    %v1811 = vld [vmem:[%s19 + $0x8] sm:$0xff]
    %v1812 = vld [vmem:[%s19 + $0x10] sm:$0xff]
    %v1813 = vld [vmem:[%s19 + $0x18] sm:$0xff]
    %v1814 = vld [vmem:[%s20] sm:$0x1]
    %v1816 = vlaneseq
    %v1817 = vshrl.u32 %v1816, 7
    %v1818 = vsub.s32 0, %v1817
    %v1819 = vrot.slane %v1814, %v1818
    %v1822 = vsel %vm211, %v1808, 0
    %v1825 = vsel %vm211, %v1809, 0
    %1827 = vmatprep.subr.mxu0 0.0
    %1828 = vmatpush1.msra.mxu0 %v1810
    %1829 = vmatprep.subr.mxu0 0.0
    %1830 = vmatpush1.msra.mxu0 %v1811
    %1831 = vmatprep.subr.mxu0 0.0
    %1832 = vmatpush1.msra.mxu0 %v1812
    %1833 = vmatprep.subr.mxu0 0.0
    %1834 = vmatpush1.msra.mxu0 %v1813
    %1835 = vmatprep.subr.mxu0 0.0
    %1836 = vmatpush1.msra.mxu0 0.0
    %1837 = vmatprep.subr.mxu0 0.0
    %1838 = vmatpush1.msra.mxu0 0.0
    %1839 = vmatprep.subr.mxu0 0.0
    %1840 = vmatpush1.msra.mxu0 0.0
    %1841 = vmatprep.subr.mxu0 0.0
    %1842 = vmatpush1.msra.mxu0 0.0
    %1843 = vmatprep.subr.mxu0 0.0
    %1844 = vmatpush1.msra.mxu0 0.0
    %1845 = vmatprep.subr.mxu0 0.0
    %1846 = vmatpush1.msra.mxu0 0.0
    %1847 = vmatprep.subr.mxu0 0.0
    %1848 = vmatpush1.msra.mxu0 0.0
    %1849 = vmatprep.subr.mxu0 0.0
    %1850 = vmatpush1.msra.mxu0 0.0
    %1851 = vmatprep.subr.mxu0 0.0
    %1852 = vmatpush1.msra.mxu0 0.0
    %1853 = vmatprep.subr.mxu0 0.0
    %1854 = vmatpush1.msra.mxu0 0.0
    %1855 = vmatprep.subr.mxu0 0.0
    %1856 = vmatpush1.msra.mxu0 0.0
    %1857 = vmatprep.subr.mxu0 0.0
    %1858 = vmatpush1.msra.mxu0 0.0
    %1859 = vmatprep.subr.mxu0 0.0
    %1860 = vmatpush1.msra.mxu0 0.0
    %1861 = vmatprep.subr.mxu0 0.0
    %1862 = vmatpush1.msra.mxu0 0.0
    %1863 = vmatprep.subr.mxu0 0.0
    %1864 = vmatpush1.msra.mxu0 0.0
    %1865 = vmatprep.subr.mxu0 0.0
    %1866 = vmatpush1.msra.mxu0 0.0
    %1867 = vmatprep.subr.mxu0 0.0
    %1868 = vmatpush1.msra.mxu0 0.0
    %1869 = vmatprep.subr.mxu0 0.0
    %1870 = vmatpush1.msra.mxu0 0.0
    %1871 = vmatprep.subr.mxu0 0.0
    %1872 = vmatpush1.msra.mxu0 0.0
    %1873 = vmatprep.subr.mxu0 0.0
    %1874 = vmatpush1.msra.mxu0 0.0
    %1875 = vmatprep.subr.mxu0 0.0
    %1876 = vmatpush1.msra.mxu0 0.0
    %1877 = vmatprep.subr.mxu0 0.0
    %1878 = vmatpush1.msra.mxu0 0.0
    %1879 = vmatprep.subr.mxu0 0.0
    %1880 = vmatpush1.msra.mxu0 0.0
    %1881 = vmatprep.subr.mxu0 0.0
    %1882 = vmatpush1.msra.mxu0 0.0
    %1883 = vmatprep.subr.mxu0 0.0
    %1884 = vmatpush1.msra.mxu0 0.0
    %1885 = vmatprep.subr.mxu0 0.0
    %1886 = vmatpush1.msra.mxu0 0.0
    %1887 = vmatprep.subr.mxu0 0.0
    %1888 = vmatpush1.msra.mxu0 0.0
    %1889 = vmatprep.subr.mxu0 0.0
    %1890 = vmatpush1.msra.mxu0 0.0
    %1891 = vmatprep.mubr.f32.mxu0 0.0
    %1892 = vmatmul.mubr.f32.gmra.mrb[0].mxu0 %v1822
    %v1893 = vpop.f32.mrb[0].mxu0
    %v1894 = vadd.f32 %v1819, %v1893
    %v1895 = vpop.f32.mrb[0].mxu0
    %1896 = vmatprep.mubr.f32.mxu0 0.0
    %1897 = vmatmul.mubr.f32.gmra.mrb[0].mxu0 %v1825
    %v1898 = vpop.f32.mrb[0].mxu0
    %v1899 = vadd.f32 %v1819, %v1898
    %v1900 = vpop.f32.mrb[0].mxu0
    %1901 = vdwg.mxu0
    %v1902 = vmax.f32 %v1894, 0.0
    %v1903 = vmax.f32 %v1899, 0.0
    %v1904 = vld [vmem:[%s21] sm:$0xff]
    %v1905 = vld [vmem:[%s21 + $0x8] sm:$0xff]
    %v1906 = vld [vmem:[%s21 + $0x10] sm:$0xff]
    %v1907 = vld [vmem:[%s21 + $0x18] sm:$0xff]
    %v1908 = vld [vmem:[%s21 + $0x20] sm:$0xff]
    %v1909 = vld [vmem:[%s21 + $0x28] sm:$0xff]
    %v1910 = vld [vmem:[%s21 + $0x30] sm:$0xff]
    %v1911 = vld [vmem:[%s21 + $0x38] sm:$0xff]
    %v1912 = vld [vmem:[%s22] sm:$0x1]
    %v1914 = vlaneseq
    %v1915 = vshrl.u32 %v1914, 7
    %v1916 = vsub.s32 0, %v1915
    %v1917 = vrot.slane %v1912, %v1916
    %v1920 = vsel %vm483, %v1902, 0
    %v1923 = vsel %vm483, %v1903, 0
    %1925 = vmatprep.subr.mxu0 0.0
    %1926 = vmatpush1.msra.mxu0 %v1904
    %1927 = vmatprep.subr.mxu0 0.0
    %1928 = vmatpush1.msra.mxu0 %v1905
    %1929 = vmatprep.subr.mxu0 0.0
    %1930 = vmatpush1.msra.mxu0 %v1906
    %1931 = vmatprep.subr.mxu0 0.0
    %1932 = vmatpush1.msra.mxu0 %v1907
    %1933 = vmatprep.subr.mxu0 0.0
    %1934 = vmatpush1.msra.mxu0 %v1908
    %1935 = vmatprep.subr.mxu0 0.0
    %1936 = vmatpush1.msra.mxu0 %v1909
    %1937 = vmatprep.subr.mxu0 0.0
    %1938 = vmatpush1.msra.mxu0 %v1910
    %1939 = vmatprep.subr.mxu0 0.0
    %1940 = vmatpush1.msra.mxu0 %v1911
    %1941 = vmatprep.subr.mxu0 0.0
    %1942 = vmatpush1.msra.mxu0 0.0
    %1943 = vmatprep.subr.mxu0 0.0
    %1944 = vmatpush1.msra.mxu0 0.0
    %1945 = vmatprep.subr.mxu0 0.0
    %1946 = vmatpush1.msra.mxu0 0.0
    %1947 = vmatprep.subr.mxu0 0.0
    %1948 = vmatpush1.msra.mxu0 0.0
    %1949 = vmatprep.subr.mxu0 0.0
    %1950 = vmatpush1.msra.mxu0 0.0
    %1951 = vmatprep.subr.mxu0 0.0
    %1952 = vmatpush1.msra.mxu0 0.0
    %1953 = vmatprep.subr.mxu0 0.0
    %1954 = vmatpush1.msra.mxu0 0.0
    %1955 = vmatprep.subr.mxu0 0.0
    %1956 = vmatpush1.msra.mxu0 0.0
    %1957 = vmatprep.subr.mxu0 0.0
    %1958 = vmatpush1.msra.mxu0 0.0
    %1959 = vmatprep.subr.mxu0 0.0
    %1960 = vmatpush1.msra.mxu0 0.0
    %1961 = vmatprep.subr.mxu0 0.0
    %1962 = vmatpush1.msra.mxu0 0.0
    %1963 = vmatprep.subr.mxu0 0.0
    %1964 = vmatpush1.msra.mxu0 0.0
    %1965 = vmatprep.subr.mxu0 0.0
    %1966 = vmatpush1.msra.mxu0 0.0
    %1967 = vmatprep.subr.mxu0 0.0
    %1968 = vmatpush1.msra.mxu0 0.0
    %1969 = vmatprep.subr.mxu0 0.0
    %1970 = vmatpush1.msra.mxu0 0.0
    %1971 = vmatprep.subr.mxu0 0.0
    %1972 = vmatpush1.msra.mxu0 0.0
    %1973 = vmatprep.subr.mxu0 0.0
    %1974 = vmatpush1.msra.mxu0 0.0
    %1975 = vmatprep.subr.mxu0 0.0
    %1976 = vmatpush1.msra.mxu0 0.0
    %1977 = vmatprep.subr.mxu0 0.0
    %1978 = vmatpush1.msra.mxu0 0.0
    %1979 = vmatprep.subr.mxu0 0.0
    %1980 = vmatpush1.msra.mxu0 0.0
    %1981 = vmatprep.subr.mxu0 0.0
    %1982 = vmatpush1.msra.mxu0 0.0
    %1983 = vmatprep.subr.mxu0 0.0
    %1984 = vmatpush1.msra.mxu0 0.0
    %1985 = vmatprep.subr.mxu0 0.0
    %1986 = vmatpush1.msra.mxu0 0.0
    %1987 = vmatprep.subr.mxu0 0.0
    %1988 = vmatpush1.msra.mxu0 0.0
    %1989 = vmatprep.mubr.f32.mxu0 0.0
    %1990 = vmatmul.mubr.f32.gmra.mrb[0].mxu0 %v1920
    %v1991 = vpop.f32.mrb[0].mxu0
    %v1992 = vadd.f32 %v1917, %v1991
    %v1993 = vpop.f32.mrb[0].mxu0
    %1994 = vmatprep.mubr.f32.mxu0 0.0
    %1995 = vmatmul.mubr.f32.gmra.mrb[0].mxu0 %v1923
    %v1996 = vpop.f32.mrb[0].mxu0
    %v1997 = vadd.f32 %v1917, %v1996
    %v1998 = vpop.f32.mrb[0].mxu0
    %1999 = vdwg.mxu0
    %v2000 = vadd.f32 %v1808, %v1992
    %v2001 = vadd.f32 %v1809, %v1997
    %v2002 = vld [vmem:[%s23] sm:$0x1]
    %v2003 = vld [vmem:[%s23 + $0x1] sm:$0x1]
    %v2004 = vsel %vm211, %v2000, 0.0
    %2005 = vadd.xlane.f32.xlu0 %v2004
    %v2006 = vpop.xlane.xlu0 %2005
    %v2007 = vsel %vm211, %v2001, 0.0
    %2008 = vadd.xlane.f32.xlu0 %v2007
    %v2009 = vpop.xlane.xlu0 %2008
    %v2010 = vmul.f32 %v2006, %v859
    %v2011 = vmul.f32 %v2009, %v859
    %v2012 = vsub.f32 %v2000, %v2010
    %v2013 = vsub.f32 %v2001, %v2011
    %v2014 = vmul.f32 %v2012, %v2012
    %v2015 = vmul.f32 %v2013, %v2013
    %v2016 = vsel %vm211, %v2014, 0.0
    %2017 = vadd.xlane.f32.xlu0 %v2016
    %v2018 = vpop.xlane.xlu0 %2017
    %v2019 = vsel %vm211, %v2015, 0.0
    %2020 = vadd.xlane.f32.xlu0 %v2019
    %v2021 = vpop.xlane.xlu0 %2020
    %v2022 = vmul.f32 %v2018, %v859
    %v2023 = vmul.f32 %v2021, %v859
    %v2024 = vadd.f32 %v2022, 1e-05
    %v2025 = vadd.f32 %v2023, 1e-05
    %v2026 = vrsqrt.pop %v2024
    %v2027 = vrsqrt.pop %v2025
    %v2028 = vmul.f32 %v2012, %v2026
    %v2029 = vmul.f32 %v2013, %v2027
    %v2030 = vlaneseq
    %v2031 = vshrl.u32 %v2030, 7
    %v2032 = vsub.s32 0, %v2031
    %v2033 = vrot.slane %v2002, %v2032
    %v2034 = vmul.f32 %v2028, %v2033
    %v2035 = vmul.f32 %v2029, %v2033
    %v2036 = vlaneseq
    %v2037 = vshrl.u32 %v2036, 7
    %v2038 = vsub.s32 0, %v2037
    %v2039 = vrot.slane %v2003, %v2038
    %v2040 = vadd.f32 %v2034, %v2039
    %v2041 = vadd.f32 %v2035, %v2039
    %v2042 = vld [vmem:[%s24] sm:$0xff]
    %v2043 = vld [vmem:[%s24 + $0x8] sm:$0xff]
    %v2044 = vld [vmem:[%s24 + $0x10] sm:$0xff]
    %v2045 = vld [vmem:[%s24 + $0x18] sm:$0xff]
    %v2046 = vld [vmem:[%s25] sm:$0x1]
    %v2048 = vlaneseq
    %v2049 = vshrl.u32 %v2048, 7
    %v2050 = vsub.s32 0, %v2049
    %v2051 = vrot.slane %v2046, %v2050
    %v2054 = vsel %vm211, %v2040, 0
    %v2057 = vsel %vm211, %v2041, 0
    %2059 = vmatprep.subr.mxu0 0.0
    %2060 = vmatpush1.msra.mxu0 %v2042
    %2061 = vmatprep.subr.mxu0 0.0
    %2062 = vmatpush1.msra.mxu0 %v2043
    %2063 = vmatprep.subr.mxu0 0.0
    %2064 = vmatpush1.msra.mxu0 %v2044
    %2065 = vmatprep.subr.mxu0 0.0
    %2066 = vmatpush1.msra.mxu0 %v2045
    %2067 = vmatprep.subr.mxu0 0.0
    %2068 = vmatpush1.msra.mxu0 0.0
    %2069 = vmatprep.subr.mxu0 0.0
    %2070 = vmatpush1.msra.mxu0 0.0
    %2071 = vmatprep.subr.mxu0 0.0
    %2072 = vmatpush1.msra.mxu0 0.0
    %2073 = vmatprep.subr.mxu0 0.0
    %2074 = vmatpush1.msra.mxu0 0.0
    %2075 = vmatprep.subr.mxu0 0.0
    %2076 = vmatpush1.msra.mxu0 0.0
    %2077 = vmatprep.subr.mxu0 0.0
    %2078 = vmatpush1.msra.mxu0 0.0
    %2079 = vmatprep.subr.mxu0 0.0
    %2080 = vmatpush1.msra.mxu0 0.0
    %2081 = vmatprep.subr.mxu0 0.0
    %2082 = vmatpush1.msra.mxu0 0.0
    %2083 = vmatprep.subr.mxu0 0.0
    %2084 = vmatpush1.msra.mxu0 0.0
    %2085 = vmatprep.subr.mxu0 0.0
    %2086 = vmatpush1.msra.mxu0 0.0
    %2087 = vmatprep.subr.mxu0 0.0
    %2088 = vmatpush1.msra.mxu0 0.0
    %2089 = vmatprep.subr.mxu0 0.0
    %2090 = vmatpush1.msra.mxu0 0.0
    %2091 = vmatprep.subr.mxu0 0.0
    %2092 = vmatpush1.msra.mxu0 0.0
    %2093 = vmatprep.subr.mxu0 0.0
    %2094 = vmatpush1.msra.mxu0 0.0
    %2095 = vmatprep.subr.mxu0 0.0
    %2096 = vmatpush1.msra.mxu0 0.0
    %2097 = vmatprep.subr.mxu0 0.0
    %2098 = vmatpush1.msra.mxu0 0.0
    %2099 = vmatprep.subr.mxu0 0.0
    %2100 = vmatpush1.msra.mxu0 0.0
    %2101 = vmatprep.subr.mxu0 0.0
    %2102 = vmatpush1.msra.mxu0 0.0
    %2103 = vmatprep.subr.mxu0 0.0
    %2104 = vmatpush1.msra.mxu0 0.0
    %2105 = vmatprep.subr.mxu0 0.0
    %2106 = vmatpush1.msra.mxu0 0.0
    %2107 = vmatprep.subr.mxu0 0.0
    %2108 = vmatpush1.msra.mxu0 0.0
    %2109 = vmatprep.subr.mxu0 0.0
    %2110 = vmatpush1.msra.mxu0 0.0
    %2111 = vmatprep.subr.mxu0 0.0
    %2112 = vmatpush1.msra.mxu0 0.0
    %2113 = vmatprep.subr.mxu0 0.0
    %2114 = vmatpush1.msra.mxu0 0.0
    %2115 = vmatprep.subr.mxu0 0.0
    %2116 = vmatpush1.msra.mxu0 0.0
    %2117 = vmatprep.subr.mxu0 0.0
    %2118 = vmatpush1.msra.mxu0 0.0
    %2119 = vmatprep.subr.mxu0 0.0
    %2120 = vmatpush1.msra.mxu0 0.0
    %2121 = vmatprep.subr.mxu0 0.0
    %2122 = vmatpush1.msra.mxu0 0.0
    %2123 = vmatprep.mubr.f32.mxu0 0.0
    %2124 = vmatmul.mubr.f32.gmra.mrb[0].mxu0 %v2054
    %v2125 = vpop.f32.mrb[0].mxu0
    %v2126 = vadd.f32 %v2051, %v2125
    %v2127 = vpop.f32.mrb[0].mxu0
    %2128 = vmatprep.mubr.f32.mxu0 0.0
    %2129 = vmatmul.mubr.f32.gmra.mrb[0].mxu0 %v2057
    %v2130 = vpop.f32.mrb[0].mxu0
    %v2131 = vadd.f32 %v2051, %v2130
    %v2132 = vpop.f32.mrb[0].mxu0
    %2133 = vdwg.mxu0
    %2134 = vst [vmem:[#allocation2] sm:$0xff] %v2126
    %2135 = vst [vmem:[#allocation2 + $0x8] sm:$0xff] %v2131
    // Predicated region
    $region106: #{decoder_only_transformer_forward.1} parent=1 // pred_check
      _
    $region107: #{decoder_only_transformer_forward.1} parent=1 // pred_check_branch
      %2137 = sbr.rel (0) target = $region109
    $region108: #{decoder_only_transformer_forward.1} parent=1 // pred_region
      %s2139 = ssub.s32 256, 256
      %2140 = vsyncadd [#allocation3], %s2139
      %s2141 = sshll.u32 [#allocation2], 4
      %s2142 = int_to_ptr.vmem [resolvable:$true] %s2141
      %2147 = dma.vmem_to_hbm [thread:$0]  %s2142, 256, %s26, [#allocation3], 128, 128, 8
    $region109: #{decoder_only_transformer_forward.1} parent=1 // pred_fallthru
      _
    // Predicated region
    $region110: #{decoder_only_transformer_forward.1} parent=1 // pred_check
      _
    $region111: #{decoder_only_transformer_forward.1} parent=1 // pred_check_branch
      %2149 = sbr.rel (0) target = $region113
    $region112: #{decoder_only_transformer_forward.1} parent=1 // pred_region
      %2150 = dma.done [#allocation3], 256
    $region113: #{decoder_only_transformer_forward.1} parent=1 // pred_fallthru
      _
    %2151 = vsyncpa [#allocation3], 1

</llo_original>
